<compile_context>
chip_gen: v7x
topology: tpu7x:2x2x1
jax: 0.10.0
libtpu: 0.0.40
codegen_flags: <defaults>
</compile_context>

<pallas_src>
import functools

import jax
import jax.numpy as jnp
from jax.experimental import pallas as pl
from jax.experimental.pallas import tpu as pltpu

OUT_DIM = 32
LOG2 = 0.6931471805599453
MATMUL_DTYPE = jnp.bfloat16   # MXU operand dtype; accumulation stays f32
MAX_TILE_M = 256              # row tile; ~100 KB live VMEM, safe on v5e/v6e/v7x


def _vmem():
    return pl.BlockSpec(memory_space=pltpu.MemorySpace.VMEM)


def _smem():
    return pl.BlockSpec(memory_space=pltpu.MemorySpace.SMEM)


def _round_up(x, m):
    return (x + m - 1) // m * m


def _prelu(v, a):
    # nn.PReLU() with a single learnable scalar: max(0,v) + a*min(0,v)  (f32)
    return jnp.maximum(v, 0.0) + a * jnp.minimum(v, 0.0)


def _mlp_body(x, w1s, b1s, w2, b2, w3, b3, a0, a1, a2, d):
    """fcs(x) + linear_shortcut(x), with w1 || ws fused into one [d, 2d] matmul."""
    y = jnp.dot(x, w1s, preferred_element_type=jnp.float32) + b1s     # [m, 2d] f32
    h, sc = y[:, :d], y[:, d:]
    h = _prelu(h, a0)
    h = jnp.dot(h.astype(w2.dtype), w2, preferred_element_type=jnp.float32) + b2
    h = _prelu(h, a1)
    h = jnp.dot(h.astype(w3.dtype), w3, preferred_element_type=jnp.float32) + b3
    h = _prelu(h, a2)
    return h + sc


# ----------------------------------------------------------------------------
# Kernel 1: small grid-less MLP (used once, on the 6 stacked graph embeddings)
# ----------------------------------------------------------------------------
def mlp_kernel(x_ref, w1s_ref, b1s_ref, w2_ref, b2_ref, w3_ref, b3_ref,
               a_ref, o_ref, *, d):
    o_ref[...] = _mlp_body(x_ref[...], w1s_ref[...], b1s_ref[...],
                           w2_ref[...], b2_ref[...], w3_ref[...], b3_ref[...],
                           a_ref[0], a_ref[1], a_ref[2], d)


def mlp_forward(x, p):
    """Grid-less MLP for the tiny stacked graph-level input [6*G, D]."""
    n, d = x.shape
    dt = MATMUL_DTYPE
    return pl.pallas_call(
        functools.partial(mlp_kernel, d=d),
        out_shape=jax.ShapeDtypeStruct((n, d), jnp.float32),
        in_specs=[_vmem()] * 7 + [_smem()],
        out_specs=_vmem(),
    )(x.astype(dt), p["w1s"].astype(dt), p["b1s"],
      p["w2"].astype(dt), p["b2"], p["w3"].astype(dt), p["b3"], p["alphas"])


# ----------------------------------------------------------------------------
# Kernel 2: fused local_mlp projection + InfoGraph JSD local/global loss.
#   grid = (6 loss terms, row tiles); weights + projected globals stay resident;
#   the scalar loss is accumulated into an SMEM output across the whole grid.
# ----------------------------------------------------------------------------
def local_mlp_jsd_kernel(z_ref, bid_ref, g_ref, w1s_ref, b1s_ref, w2_ref,
                         b2_ref, w3_ref, b3_ref, a_ref, o_ref,
                         *, d, inv_pos, inv_neg):
    t = pl.program_id(0)
    i = pl.program_id(1)

    @pl.when((t == 0) & (i == 0))
    def _():
        o_ref[0, 0] = 0.0

    # --- local_mlp projection of this row tile (fused fcs + shortcut) -------
    zp = _mlp_body(z_ref[...], w1s_ref[...], b1s_ref[...],
                   w2_ref[...], b2_ref[...], w3_ref[...], b3_ref[...],
                   a_ref[0], a_ref[1], a_ref[2], d)            # [tile_m, d] f32

    # --- similarity vs. resident projected globals (no host transpose) ------
    g = g_ref[...]                                             # [G, d] f32
    res = jax.lax.dot_general(zp, g, (((1,), (1,)), ((), ())),
                              preferred_element_type=jnp.float32)  # [tile_m, G]

    # --- pos/neg masks built in-kernel from int32 batch ids (pad rows = -1) -
    bid = bid_ref[...]                                         # [tile_m, 1] i32
    cols = jax.lax.broadcasted_iota(jnp.int32, res.shape, 1)
    pos_mask = (cols == bid).astype(jnp.float32)               # 0 for pad rows
    valid = (bid >= 0).astype(jnp.float32)
    neg_mask = valid * (1.0 - pos_mask)

    # --- JSD expectations: one softplus per element, one fused reduction ----
    sp = jax.nn.softplus(-res)
    pos_term = LOG2 - sp                 # E_pos contribution
    neg_term = res + sp - LOG2           # E_neg contribution
    tile_sum = jnp.sum(inv_neg * (neg_mask * neg_term)
                       - inv_pos * (pos_mask * pos_term))
    o_ref[0, 0] += tile_sum


def fused_local_loss(z_stack, bid_stack, g_proj, p, n_nodes, n_graphs, tile_m):
    terms, n_pad, d = z_stack.shape
    dt = MATMUL_DTYPE
    inv_pos = 1.0 / float(n_nodes)
    # NOTE: matches the reference local_global_loss_; n_graphs == 1 divides by
    # zero there as well (listed as a pre-existing correctness concern).
    inv_neg = 1.0 / (float(n_nodes) * (float(n_graphs) - 1.0))
    kern = functools.partial(local_mlp_jsd_kernel, d=d,
                             inv_pos=inv_pos, inv_neg=inv_neg)
    const = lambda t, i: (0, 0)
    out = pl.pallas_call(
        kern,
        out_shape=jax.ShapeDtypeStruct((1, 1), jnp.float32),
        grid=(terms, n_pad // tile_m),
        in_specs=[
            pl.BlockSpec((None, tile_m, d), lambda t, i: (t, i, 0)),    # z tile
            pl.BlockSpec((None, tile_m, 1), lambda t, i: (t, i, 0)),    # batch
            pl.BlockSpec((None, n_graphs, d), lambda t, i: (t, 0, 0)),  # g (resident/term)
            pl.BlockSpec((d, 2 * d), const),                            # w1 || ws
            pl.BlockSpec((1, 2 * d), const),                            # b1 || bs
            pl.BlockSpec((d, d), const),                                # w2
            pl.BlockSpec((1, d), const),                                # b2
            pl.BlockSpec((d, d), const),                                # w3
            pl.BlockSpec((1, d), const),                                # b3
            _smem(),                                                    # PReLU alphas
        ],
        out_specs=pl.BlockSpec((1, 1), const,
                               memory_space=pltpu.MemorySpace.SMEM),
        compiler_params=pltpu.CompilerParams(
            # both grid axes reduce into the same scalar accumulator
            dimension_semantics=("arbitrary", "arbitrary"),
            vmem_limit_bytes=32 * 1024 * 1024),
    )(z_stack.astype(dt), bid_stack, g_proj,
      p["w1s"].astype(dt), p["b1s"], p["w2"].astype(dt), p["b2"],
      p["w3"].astype(dt), p["b3"], p["alphas"])
    return out[0, 0]


# ----------------------------------------------------------------------------
# External pieces the module depends on but does not define.
# ----------------------------------------------------------------------------
def identity_aug(x, edge_index):
    # TODO(synk): the augmentor pair is injected from outside (GCL augmentors);
    # a deterministic identity augmentation stands in.
    return x, edge_index, None


def encoder_forward(x, edge_index, edge_weight, batch, enc_params, n_graphs):
    # TODO(synk): encoder.conv{1,2,3} (GNN convs + graph readout) are external
    # to this module; a deterministic Linear+ReLU node encoder with mean
    # pooling over `batch` stands in (glue JAX, not the Pallas hot path).
    z = jax.nn.relu(x @ enc_params["w"] + enc_params["b"])
    ones = jnp.ones((x.shape[0],), jnp.float32)
    counts = jax.ops.segment_sum(ones, batch, num_segments=n_graphs)
    g = jax.ops.segment_sum(z, batch, num_segments=n_graphs) / counts[:, None]
    return z, g


# ----------------------------------------------------------------------------
# Parameter initialization (deterministic, PyTorch-Linear-style uniform).
# ----------------------------------------------------------------------------
def _init_linear(key, i, o):
    kw, kb = jax.random.split(key)
    bound = 1.0 / jnp.sqrt(jnp.float32(i))
    w = jax.random.uniform(kw, (i, o), jnp.float32, -bound, bound)
    b = jax.random.uniform(kb, (1, o), jnp.float32, -bound, bound)
    return w, b


def init_mlp_params(key, in_dim, out_dim):
    ks = jax.random.split(key, 4)
    w1, b1 = _init_linear(ks[0], in_dim, out_dim)
    w2, b2 = _init_linear(ks[1], out_dim, out_dim)
    w3, b3 = _init_linear(ks[2], out_dim, out_dim)
    ws, bs = _init_linear(ks[3], in_dim, out_dim)
    return {
        # first Linear and shortcut Linear fused into one [in, 2*out] matmul
        "w1s": jnp.concatenate([w1, ws], axis=1),
        "b1s": jnp.concatenate([b1, bs], axis=1),
        "w2": w2, "b2": b2, "w3": w3, "b3": b3,
        # three independent nn.PReLU() scalars (default init 0.25 each)
        "alphas": jnp.full((3,), 0.25, jnp.float32),
    }


def init_hgcl_params(key, out_dim):
    ks = jax.random.split(key, 5)
    enc = []
    for i in range(3):
        w, b = _init_linear(ks[i], out_dim, out_dim)
        enc.append({"w": w, "b": b})
    return {"enc1": enc[0], "enc2": enc[1], "enc3": enc[2],
            "local_mlp": init_mlp_params(ks[3], out_dim, out_dim),
            "global_mlp": init_mlp_params(ks[4], out_dim, out_dim)}


# ----------------------------------------------------------------------------
# HGCL.forward  (2 pallas_calls total)
# ----------------------------------------------------------------------------
@functools.partial(jax.jit, static_argnames=("n_graphs",))
def hgcl_forward(params, x1, x2, x3, ei1, ei2, ei3, b1, b2, b3, n_graphs):
    aug1, aug2 = identity_aug, identity_aug
    views = ((x1, ei1, b1, params["enc1"]),
             (x2, ei2, b2, params["enc2"]),
             (x3, ei3, b3, params["enc3"]))
    z_terms, g_terms, batch_terms = [], [], []
    for xi, ei, bi, enc in views:
        xa1, eia1, ewa1 = aug1(xi, ei)
        xa2, eia2, ewa2 = aug2(xi, ei)
        z_a, g_a = encoder_forward(xa1, eia1, ewa1, bi, enc, n_graphs)
        z_b, g_b = encoder_forward(xa2, eia2, ewa2, bi, enc, n_graphs)
        # loss terms of this view: (z_a, g_b) and (z_b, g_a)
        z_terms += [z_a, z_b]
        g_terms += [g_b, g_a]
        batch_terms += [bi, bi]

    d = z_terms[0].shape[1]
    n = z_terms[0].shape[0]
    # TODO(synk): all three views are assumed to share the node count; ragged
    # views would be padded to the common max with batch id -1 (masked rows).

    # ---- one Pallas call for all 6 graph-level projections (global_mlp) ----
    g_proj = mlp_forward(jnp.concatenate(g_terms, axis=0), params["global_mlp"])
    g_proj = g_proj.reshape(len(g_terms), n_graphs, d)

    # ---- one fused Pallas call: local_mlp projection + JSD loss ------------
    sub = 16 if MATMUL_DTYPE == jnp.bfloat16 else 8
    tile_m = min(MAX_TILE_M, _round_up(n, sub))
    n_pad = _round_up(_round_up(n, sub), tile_m)
    z_stack = jnp.stack([jnp.pad(z, ((0, n_pad - n), (0, 0))) for z in z_terms])
    bid_stack = jnp.stack(
        [jnp.pad(b.astype(jnp.int32), (0, n_pad - n), constant_values=-1)
         for b in batch_terms])[..., None]
    return fused_local_loss(z_stack, bid_stack, g_proj, params["local_mlp"],
                            n, n_graphs, tile_m)


# ----------------------------------------------------------------------------
# Pure-JAX reference (same bf16-operand / f32-accum precision path).
# ----------------------------------------------------------------------------
def _mlp_ref(x, p):
    dt = MATMUL_DTYPE
    d = p["w2"].shape[0]
    y = jnp.dot(x.astype(dt), p["w1s"].astype(dt),
                preferred_element_type=jnp.float32) + p["b1s"]
    h, sc = y[:, :d], y[:, d:]
    h = _prelu(h, p["alphas"][0])
    h = jnp.dot(h.astype(dt), p["w2"].astype(dt),
                preferred_element_type=jnp.float32) + p["b2"]
    h = _prelu(h, p["alphas"][1])
    h = jnp.dot(h.astype(dt), p["w3"].astype(dt),
                preferred_element_type=jnp.float32) + p["b3"]
    h = _prelu(h, p["alphas"][2])
    return h + sc


def _jsd_ref(l_enc, g_enc, batch):
    n, g = l_enc.shape[0], g_enc.shape[0]
    pos = (batch[:, None] == jnp.arange(g)[None, :]).astype(jnp.float32)
    neg = 1.0 - pos
    res = l_enc @ g_enc.T
    e_pos = jnp.sum(LOG2 - jax.nn.softplus(-(res * pos))) / n
    e_neg = jnp.sum(jax.nn.softplus(-(res * neg)) + res * neg - LOG2) / (n * (g - 1.0))
    return e_neg - e_pos


def hgcl_forward_ref(params, x1, x2, x3, ei1, ei2, ei3, b1, b2, b3, n_graphs):
    views = ((x1, ei1, b1, params["enc1"]),
             (x2, ei2, b2, params["enc2"]),
             (x3, ei3, b3, params["enc3"]))
    total = jnp.float32(0.0)
    for xi, ei, bi, enc in views:
        xa1, eia1, ewa1 = identity_aug(xi, ei)
        xa2, eia2, ewa2 = identity_aug(xi, ei)
        z_a, g_a = encoder_forward(xa1, eia1, ewa1, bi, enc, n_graphs)
        z_b, g_b = encoder_forward(xa2, eia2, ewa2, bi, enc, n_graphs)
        z_a = _mlp_ref(z_a, params["local_mlp"])
        z_b = _mlp_ref(z_b, params["local_mlp"])
        g_a = _mlp_ref(g_a, params["global_mlp"])
        g_b = _mlp_ref(g_b, params["global_mlp"])
        total = total + _jsd_ref(z_a, g_b, bi) + _jsd_ref(z_b, g_a, bi)
    return total


if __name__ == "__main__":
    key = jax.random.PRNGKey(0)
    kp, k1, k2, k3 = jax.random.split(key, 4)

    N, D, G = 16, OUT_DIM, 2          # 16 nodes per view, out_dim=32, 2 graphs
    params = init_hgcl_params(kp, D)

    x1 = jax.random.normal(k1, (N, D), jnp.float32)
    x2 = jax.random.normal(k2, (N, D), jnp.float32)
    x3 = jax.random.normal(k3, (N, D), jnp.float32)
    batch = jnp.array([0] * (N // 2) + [1] * (N // 2), jnp.int32)
    edge_index = jnp.zeros((2, 4), jnp.int32)   # unused by surrogate encoder

    loss = hgcl_forward(params, x1, x2, x3,
                        edge_index, edge_index, edge_index,
                        batch, batch, batch, n_graphs=G)
    loss = jax.block_until_ready(loss)

    ref = hgcl_forward_ref(params, x1, x2, x3,
                           edge_index, edge_index, edge_index,
                           batch, batch, batch, G)
    assert loss.shape == () and jnp.isfinite(loss)
    assert jnp.allclose(loss, ref, rtol=2e-2, atol=2e-2), (loss, ref)
    print("KERNEL_OK")
</pallas_src>

<mosaic_0001>
module attributes {stable_mosaic.version = 11 : i64} {
  func.func private @main(%arg0: i32) attributes {dimension_semantics = [#tpu.dimension_semantics<core_parallel>], iteration_bounds = array<i64: 2>, tpu.core_type = #tpu.core_type<sc_scalar_subcore>, window_params = []} {
    return
  }
}

module attributes {stable_mosaic.version = 11 : i64} {
  func.func private @main(%arg0: i32) attributes {dimension_semantics = [#tpu.dimension_semantics<core_parallel>], iteration_bounds = array<i64: 2>, tpu.core_type = #tpu.core_type<sc_scalar_subcore>, window_params = []} {
    return
  }
}

module attributes {stable_mosaic.version = 11 : i64} {
  func.func @mlp_kernel(%arg0: memref<12x32xbf16, #tpu.memory_space<vmem>>, %arg1: memref<32x64xbf16, #tpu.memory_space<vmem>>, %arg2: memref<1x64xf32, #tpu.memory_space<vmem>>, %arg3: memref<32x32xbf16, #tpu.memory_space<vmem>>, %arg4: memref<1x32xf32, #tpu.memory_space<vmem>>, %arg5: memref<32x32xbf16, #tpu.memory_space<vmem>>, %arg6: memref<1x32xf32, #tpu.memory_space<vmem>>, %arg7: memref<3xf32, #tpu.memory_space<smem>>, %arg8: memref<12x32xf32, #tpu.memory_space<vmem>>) attributes {dimension_semantics = [], scalar_prefetch = 0 : i64, scratch_operands = 0 : i64, tpu.core_type = #tpu.core_type<tc>} {
    %c0 = arith.constant 0 : index
    %c0_0 = arith.constant 0 : index
    %0 = vector.load %arg0[%c0, %c0_0] : memref<12x32xbf16, #tpu.memory_space<vmem>>, vector<12x32xbf16>
    %c0_1 = arith.constant 0 : index
    %c0_2 = arith.constant 0 : index
    %1 = vector.load %arg1[%c0_1, %c0_2] : memref<32x64xbf16, #tpu.memory_space<vmem>>, vector<32x64xbf16>
    %c0_3 = arith.constant 0 : index
    %c0_4 = arith.constant 0 : index
    %2 = vector.load %arg2[%c0_3, %c0_4] : memref<1x64xf32, #tpu.memory_space<vmem>>, vector<1x64xf32>
    %c0_5 = arith.constant 0 : index
    %c0_6 = arith.constant 0 : index
    %3 = vector.load %arg3[%c0_5, %c0_6] : memref<32x32xbf16, #tpu.memory_space<vmem>>, vector<32x32xbf16>
    %c0_7 = arith.constant 0 : index
    %c0_8 = arith.constant 0 : index
    %4 = vector.load %arg4[%c0_7, %c0_8] : memref<1x32xf32, #tpu.memory_space<vmem>>, vector<1x32xf32>
    %c0_9 = arith.constant 0 : index
    %c0_10 = arith.constant 0 : index
    %5 = vector.load %arg5[%c0_9, %c0_10] : memref<32x32xbf16, #tpu.memory_space<vmem>>, vector<32x32xbf16>
    %c0_11 = arith.constant 0 : index
    %c0_12 = arith.constant 0 : index
    %6 = vector.load %arg6[%c0_11, %c0_12] : memref<1x32xf32, #tpu.memory_space<vmem>>, vector<1x32xf32>
    %c0_13 = arith.constant 0 : index
    %7 = memref.load %arg7[%c0_13] : memref<3xf32, #tpu.memory_space<smem>>
    %c1 = arith.constant 1 : index
    %8 = memref.load %arg7[%c1] : memref<3xf32, #tpu.memory_space<smem>>
    %c2 = arith.constant 2 : index
    %9 = memref.load %arg7[%c2] : memref<3xf32, #tpu.memory_space<smem>>
    %cst = arith.constant dense<0.000000e+00> : vector<12x64xf32>
    %10 = tpu.matmul %0, %1, %cst {dimension_numbers = #tpu.dot_dimension_numbers<[1], [0], [0], [1], [0, 0, 1, 1], [], []>} : vector<12x32xbf16>, vector<32x64xbf16>, vector<12x64xf32> -> vector<12x64xf32>
    %11 = vector.broadcast %2 : vector<1x64xf32> to vector<12x64xf32>
    %12 = arith.addf %10, %11 : vector<12x64xf32>
    %13 = vector.extract_strided_slice %12 {offsets = [0, 0], sizes = [12, 32], strides = [1, 1]} : vector<12x64xf32> to vector<12x32xf32>
    %14 = vector.extract_strided_slice %12 {offsets = [0, 32], sizes = [12, 32], strides = [1, 1]} : vector<12x64xf32> to vector<12x32xf32>
    %cst_14 = arith.constant 0.000000e+00 : f32
    %15 = vector.broadcast %cst_14 : f32 to vector<12x32xf32>
    %16 = arith.maximumf %13, %15 : vector<12x32xf32>
    %cst_15 = arith.constant 0.000000e+00 : f32
    %17 = vector.broadcast %cst_15 : f32 to vector<12x32xf32>
    %18 = arith.minimumf %13, %17 : vector<12x32xf32>
    %19 = vector.broadcast %7 : f32 to vector<12x32xf32>
    %20 = arith.mulf %19, %18 : vector<12x32xf32>
    %21 = arith.addf %16, %20 : vector<12x32xf32>
    %22 = arith.truncf %21 : vector<12x32xf32> to vector<12x32xbf16>
    %cst_16 = arith.constant dense<0.000000e+00> : vector<12x32xf32>
    %23 = tpu.matmul %22, %3, %cst_16 {dimension_numbers = #tpu.dot_dimension_numbers<[1], [0], [0], [1], [0, 0, 1, 1], [], []>} : vector<12x32xbf16>, vector<32x32xbf16>, vector<12x32xf32> -> vector<12x32xf32>
    %24 = vector.broadcast %4 : vector<1x32xf32> to vector<12x32xf32>
    %25 = arith.addf %23, %24 : vector<12x32xf32>
    %cst_17 = arith.constant 0.000000e+00 : f32
    %26 = vector.broadcast %cst_17 : f32 to vector<12x32xf32>
    %27 = arith.maximumf %25, %26 : vector<12x32xf32>
    %cst_18 = arith.constant 0.000000e+00 : f32
    %28 = vector.broadcast %cst_18 : f32 to vector<12x32xf32>
    %29 = arith.minimumf %25, %28 : vector<12x32xf32>
    %30 = vector.broadcast %8 : f32 to vector<12x32xf32>
    %31 = arith.mulf %30, %29 : vector<12x32xf32>
    %32 = arith.addf %27, %31 : vector<12x32xf32>
    %33 = arith.truncf %32 : vector<12x32xf32> to vector<12x32xbf16>
    %cst_19 = arith.constant dense<0.000000e+00> : vector<12x32xf32>
    %34 = tpu.matmul %33, %5, %cst_19 {dimension_numbers = #tpu.dot_dimension_numbers<[1], [0], [0], [1], [0, 0, 1, 1], [], []>} : vector<12x32xbf16>, vector<32x32xbf16>, vector<12x32xf32> -> vector<12x32xf32>
    %35 = vector.broadcast %6 : vector<1x32xf32> to vector<12x32xf32>
    %36 = arith.addf %34, %35 : vector<12x32xf32>
    %cst_20 = arith.constant 0.000000e+00 : f32
    %37 = vector.broadcast %cst_20 : f32 to vector<12x32xf32>
    %38 = arith.maximumf %36, %37 : vector<12x32xf32>
    %cst_21 = arith.constant 0.000000e+00 : f32
    %39 = vector.broadcast %cst_21 : f32 to vector<12x32xf32>
    %40 = arith.minimumf %36, %39 : vector<12x32xf32>
    %41 = vector.broadcast %9 : f32 to vector<12x32xf32>
    %42 = arith.mulf %41, %40 : vector<12x32xf32>
    %43 = arith.addf %38, %42 : vector<12x32xf32>
    %44 = arith.addf %43, %14 : vector<12x32xf32>
    %c0_22 = arith.constant 0 : index
    %c0_23 = arith.constant 0 : index
    %45 = vector.load %arg8[%c0_22, %c0_23] : memref<12x32xf32, #tpu.memory_space<vmem>>, vector<12x32xf32>
    tpu.vector_store %arg8[%c0_22, %c0_23], %44 {strides = array<i32>} : memref<12x32xf32, #tpu.memory_space<vmem>>, vector<12x32xf32>,
    return
  }
}

module attributes {stable_mosaic.version = 11 : i64} {
  func.func @local_mlp_jsd_kernel(%arg0: i32, %arg1: i32, %arg2: memref<1x16x32xbf16, #tpu.memory_space<vmem>>, %arg3: memref<1x16x1xi32, #tpu.memory_space<vmem>>, %arg4: memref<1x2x32xf32, #tpu.memory_space<vmem>>, %arg5: memref<32x64xbf16, #tpu.memory_space<vmem>>, %arg6: memref<1x64xf32, #tpu.memory_space<vmem>>, %arg7: memref<32x32xbf16, #tpu.memory_space<vmem>>, %arg8: memref<1x32xf32, #tpu.memory_space<vmem>>, %arg9: memref<32x32xbf16, #tpu.memory_space<vmem>>, %arg10: memref<1x32xf32, #tpu.memory_space<vmem>>, %arg11: memref<3xf32, #tpu.memory_space<smem>>, %arg12: memref<1x1xf32, #tpu.memory_space<smem>>) attributes {dimension_semantics = [#tpu.dimension_semantics<arbitrary>, #tpu.dimension_semantics<arbitrary>], iteration_bounds = array<i64: 6, 1>, scalar_prefetch = 0 : i64, scratch_operands = 0 : i64, tpu.core_type = #tpu.core_type<tc>, window_params = [{transform_indices = @transform_0, window_bounds = array<i64: 1, 16, 32>}, {transform_indices = @transform_1, window_bounds = array<i64: 1, 16, 1>}, {transform_indices = @transform_2, window_bounds = array<i64: 1, 2, 32>}, {pipeline_mode = #tpu.pipeline_mode<synchronous>, transform_indices = @transform_3, window_bounds = array<i64: 32, 64>}, {pipeline_mode = #tpu.pipeline_mode<synchronous>, transform_indices = @transform_4, window_bounds = array<i64: 1, 64>}, {pipeline_mode = #tpu.pipeline_mode<synchronous>, transform_indices = @transform_5, window_bounds = array<i64: 32, 32>}, {pipeline_mode = #tpu.pipeline_mode<synchronous>, transform_indices = @transform_6, window_bounds = array<i64: 1, 32>}, {pipeline_mode = #tpu.pipeline_mode<synchronous>, transform_indices = @transform_7, window_bounds = array<i64: 32, 32>}, {pipeline_mode = #tpu.pipeline_mode<synchronous>, transform_indices = @transform_8, window_bounds = array<i64: 1, 32>}, {transform_indices = @transform_9, window_bounds = array<i64: 3>}, {transform_indices = @transform_10, window_bounds = array<i64: 1, 1>}]} {
    %c0_i32 = arith.constant 0 : i32
    %0 = arith.cmpi eq, %arg0, %c0_i32 : i32
    %c0_i32_0 = arith.constant 0 : i32
    %1 = arith.cmpi eq, %arg1, %c0_i32_0 : i32
    %2 = arith.andi %0, %1 : i1
    %3 = arith.extui %2 : i1 to i32
    %c0_i32_1 = arith.constant 0 : i32
    %4 = arith.cmpi ne, %3, %c0_i32_1 : i32
    scf.if %4 {
      %cst_46 = arith.constant 0.000000e+00 : f32
      %c0_47 = arith.constant 0 : index
      %c0_48 = arith.constant 0 : index
      %104 = memref.load %arg12[%c0_47, %c0_48] : memref<1x1xf32, #tpu.memory_space<smem>>
      memref.store %cst_46, %arg12[%c0_47, %c0_48] : memref<1x1xf32, #tpu.memory_space<smem>>
    } else {
    }
    %c0 = arith.constant 0 : index
    %c0_2 = arith.constant 0 : index
    %c0_3 = arith.constant 0 : index
    %5 = vector.load %arg2[%c0, %c0_2, %c0_3] : memref<1x16x32xbf16, #tpu.memory_space<vmem>>, vector<1x16x32xbf16>
    %6 = vector.shape_cast %5 : vector<1x16x32xbf16> to vector<16x32xbf16>
    %c0_4 = arith.constant 0 : index
    %c0_5 = arith.constant 0 : index
    %7 = vector.load %arg5[%c0_4, %c0_5] : memref<32x64xbf16, #tpu.memory_space<vmem>>, vector<32x64xbf16>
    %c0_6 = arith.constant 0 : index
    %c0_7 = arith.constant 0 : index
    %8 = vector.load %arg6[%c0_6, %c0_7] : memref<1x64xf32, #tpu.memory_space<vmem>>, vector<1x64xf32>
    %c0_8 = arith.constant 0 : index
    %c0_9 = arith.constant 0 : index
    %9 = vector.load %arg7[%c0_8, %c0_9] : memref<32x32xbf16, #tpu.memory_space<vmem>>, vector<32x32xbf16>
    %c0_10 = arith.constant 0 : index
    %c0_11 = arith.constant 0 : index
    %10 = vector.load %arg8[%c0_10, %c0_11] : memref<1x32xf32, #tpu.memory_space<vmem>>, vector<1x32xf32>
    %c0_12 = arith.constant 0 : index
    %c0_13 = arith.constant 0 : index
    %11 = vector.load %arg9[%c0_12, %c0_13] : memref<32x32xbf16, #tpu.memory_space<vmem>>, vector<32x32xbf16>
    %c0_14 = arith.constant 0 : index
    %c0_15 = arith.constant 0 : index
    %12 = vector.load %arg10[%c0_14, %c0_15] : memref<1x32xf32, #tpu.memory_space<vmem>>, vector<1x32xf32>
    %c0_16 = arith.constant 0 : index
    %13 = memref.load %arg11[%c0_16] : memref<3xf32, #tpu.memory_space<smem>>
    %c1 = arith.constant 1 : index
    %14 = memref.load %arg11[%c1] : memref<3xf32, #tpu.memory_space<smem>>
    %c2 = arith.constant 2 : index
    %15 = memref.load %arg11[%c2] : memref<3xf32, #tpu.memory_space<smem>>
    %cst = arith.constant dense<0.000000e+00> : vector<16x64xf32>
    %16 = tpu.matmul %6, %7, %cst {dimension_numbers = #tpu.dot_dimension_numbers<[1], [0], [0], [1], [0, 0, 1, 1], [], []>} : vector<16x32xbf16>, vector<32x64xbf16>, vector<16x64xf32> -> vector<16x64xf32>
    %17 = vector.broadcast %8 : vector<1x64xf32> to vector<16x64xf32>
    %18 = arith.addf %16, %17 : vector<16x64xf32>
    %19 = vector.extract_strided_slice %18 {offsets = [0, 0], sizes = [16, 32], strides = [1, 1]} : vector<16x64xf32> to vector<16x32xf32>
    %20 = vector.extract_strided_slice %18 {offsets = [0, 32], sizes = [16, 32], strides = [1, 1]} : vector<16x64xf32> to vector<16x32xf32>
    %cst_17 = arith.constant 0.000000e+00 : f32
    %21 = vector.broadcast %cst_17 : f32 to vector<16x32xf32>
    %22 = arith.maximumf %19, %21 : vector<16x32xf32>
    %cst_18 = arith.constant 0.000000e+00 : f32
    %23 = vector.broadcast %cst_18 : f32 to vector<16x32xf32>
    %24 = arith.minimumf %19, %23 : vector<16x32xf32>
    %25 = vector.broadcast %13 : f32 to vector<16x32xf32>
    %26 = arith.mulf %25, %24 : vector<16x32xf32>
    %27 = arith.addf %22, %26 : vector<16x32xf32>
    %28 = arith.truncf %27 : vector<16x32xf32> to vector<16x32xbf16>
    %cst_19 = arith.constant dense<0.000000e+00> : vector<16x32xf32>
    %29 = tpu.matmul %28, %9, %cst_19 {dimension_numbers = #tpu.dot_dimension_numbers<[1], [0], [0], [1], [0, 0, 1, 1], [], []>} : vector<16x32xbf16>, vector<32x32xbf16>, vector<16x32xf32> -> vector<16x32xf32>
    %30 = vector.broadcast %10 : vector<1x32xf32> to vector<16x32xf32>
    %31 = arith.addf %29, %30 : vector<16x32xf32>
    %cst_20 = arith.constant 0.000000e+00 : f32
    %32 = vector.broadcast %cst_20 : f32 to vector<16x32xf32>
    %33 = arith.maximumf %31, %32 : vector<16x32xf32>
    %cst_21 = arith.constant 0.000000e+00 : f32
    %34 = vector.broadcast %cst_21 : f32 to vector<16x32xf32>
    %35 = arith.minimumf %31, %34 : vector<16x32xf32>
    %36 = vector.broadcast %14 : f32 to vector<16x32xf32>
    %37 = arith.mulf %36, %35 : vector<16x32xf32>
    %38 = arith.addf %33, %37 : vector<16x32xf32>
    %39 = arith.truncf %38 : vector<16x32xf32> to vector<16x32xbf16>
    %cst_22 = arith.constant dense<0.000000e+00> : vector<16x32xf32>
    %40 = tpu.matmul %39, %11, %cst_22 {dimension_numbers = #tpu.dot_dimension_numbers<[1], [0], [0], [1], [0, 0, 1, 1], [], []>} : vector<16x32xbf16>, vector<32x32xbf16>, vector<16x32xf32> -> vector<16x32xf32>
    %41 = vector.broadcast %12 : vector<1x32xf32> to vector<16x32xf32>
    %42 = arith.addf %40, %41 : vector<16x32xf32>
    %cst_23 = arith.constant 0.000000e+00 : f32
    %43 = vector.broadcast %cst_23 : f32 to vector<16x32xf32>
    %44 = arith.maximumf %42, %43 : vector<16x32xf32>
    %cst_24 = arith.constant 0.000000e+00 : f32
    %45 = vector.broadcast %cst_24 : f32 to vector<16x32xf32>
    %46 = arith.minimumf %42, %45 : vector<16x32xf32>
    %47 = vector.broadcast %15 : f32 to vector<16x32xf32>
    %48 = arith.mulf %47, %46 : vector<16x32xf32>
    %49 = arith.addf %44, %48 : vector<16x32xf32>
    %50 = arith.addf %49, %20 : vector<16x32xf32>
    %c0_25 = arith.constant 0 : index
    %c0_26 = arith.constant 0 : index
    %c0_27 = arith.constant 0 : index
    %51 = vector.load %arg4[%c0_25, %c0_26, %c0_27] : memref<1x2x32xf32, #tpu.memory_space<vmem>>, vector<1x2x32xf32>
    %52 = vector.shape_cast %51 : vector<1x2x32xf32> to vector<2x32xf32>
    %cst_28 = arith.constant dense<0.000000e+00> : vector<16x2xf32>
    %53 = tpu.matmul %50, %52, %cst_28 {dimension_numbers = #tpu.dot_dimension_numbers<[1], [1], [0], [0], [0, 0, 1, 0], [], []>} : vector<16x32xf32>, vector<2x32xf32>, vector<16x2xf32> -> vector<16x2xf32>
    %c0_29 = arith.constant 0 : index
    %c0_30 = arith.constant 0 : index
    %c0_31 = arith.constant 0 : index
    %54 = vector.load %arg3[%c0_29, %c0_30, %c0_31] : memref<1x16x1xi32, #tpu.memory_space<vmem>>, vector<1x16x1xi32>
    %55 = vector.shape_cast %54 : vector<1x16x1xi32> to vector<16x1xi32>
    %56 = tpu.iota {dimensions = array<i32: 1>} : vector<16x2xi32>
    %57 = vector.broadcast %55 : vector<16x1xi32> to vector<16x2xi32>
    %58 = arith.cmpi eq, %56, %57 : vector<16x2xi32>
    %59 = arith.extui %58 : vector<16x2xi1> to vector<16x2xi32>
    %60 = arith.sitofp %59 : vector<16x2xi32> to vector<16x2xf32>
    %c0_i32_32 = arith.constant 0 : i32
    %61 = vector.broadcast %c0_i32_32 : i32 to vector<16x1xi32>
    %62 = arith.cmpi sge, %55, %61 : vector<16x1xi32>
    %63 = arith.extui %62 : vector<16x1xi1> to vector<16x1xi32>
    %64 = arith.sitofp %63 : vector<16x1xi32> to vector<16x1xf32>
    %cst_33 = arith.constant 1.000000e+00 : f32
    %65 = vector.broadcast %cst_33 : f32 to vector<16x2xf32>
    %66 = arith.subf %65, %60 : vector<16x2xf32>
    %67 = vector.broadcast %64 : vector<16x1xf32> to vector<16x2xf32>
    %68 = arith.mulf %67, %66 : vector<16x2xf32>
    %cst_34 = arith.constant 0.000000e+00 : f32
    %69 = vector.broadcast %cst_34 : f32 to vector<16x2xf32>
    %70 = arith.subf %69, %53 : vector<16x2xf32>
    %cst_35 = arith.constant 0.000000e+00 : f32
    %71 = vector.broadcast %cst_35 : f32 to vector<16x2xf32>
    %72 = arith.maximumf %70, %71 : vector<16x2xf32>
    %73 = vector.broadcast %cst_35 : f32 to vector<16x2xf32>
    %74 = arith.subf %70, %73 : vector<16x2xf32>
    %75 = arith.cmpf one, %74, %74 : vector<16x2xf32>
    %76 = vector.broadcast %cst_35 : f32 to vector<16x2xf32>
    %77 = arith.addf %70, %76 : vector<16x2xf32>
    %78 = math.absf %74 : vector<16x2xf32>
    %cst_36 = arith.constant 0.000000e+00 : f32
    %79 = vector.broadcast %cst_36 : f32 to vector<16x2xf32>
    %80 = arith.subf %79, %78 : vector<16x2xf32>
    %81 = math.exp %80 : vector<16x2xf32>
    %82 = math.log1p %81 : vector<16x2xf32>
    %83 = arith.addf %72, %82 : vector<16x2xf32>
    %84 = arith.select %75, %77, %83 : vector<16x2xi1>, vector<16x2xf32>
    %cst_37 = arith.constant 0.693147182 : f32
    %85 = vector.broadcast %cst_37 : f32 to vector<16x2xf32>
    %86 = arith.subf %85, %84 : vector<16x2xf32>
    %87 = arith.addf %53, %84 : vector<16x2xf32>
    %cst_38 = arith.constant 0.693147182 : f32
    %88 = vector.broadcast %cst_38 : f32 to vector<16x2xf32>
    %89 = arith.subf %87, %88 : vector<16x2xf32>
    %90 = arith.mulf %68, %89 : vector<16x2xf32>
    %cst_39 = arith.constant 6.250000e-02 : f32
    %91 = vector.broadcast %cst_39 : f32 to vector<16x2xf32>
    %92 = arith.mulf %91, %90 : vector<16x2xf32>
    %93 = arith.mulf %60, %86 : vector<16x2xf32>
    %cst_40 = arith.constant 6.250000e-02 : f32
    %94 = vector.broadcast %cst_40 : f32 to vector<16x2xf32>
    %95 = arith.mulf %94, %93 : vector<16x2xf32>
    %96 = arith.subf %92, %95 : vector<16x2xf32>
    %97 = vector.shape_cast %96 : vector<16x2xf32> to vector<1x16x2xf32>
    %cst_41 = arith.constant dense<0.000000e+00> : vector<1xf32>
    %98 = vector.multi_reduction <add>, %97, %cst_41 [1, 2] : vector<1x16x2xf32> to vector<1xf32>
    %99 = vector.shape_cast %98 : vector<1xf32> to vector<1x1x1xf32>
    %100 = vector.extract %99[0, 0, 0] : f32 from vector<1x1x1xf32>
    %c0_42 = arith.constant 0 : index
    %c0_43 = arith.constant 0 : index
    %101 = memref.load %arg12[%c0_42, %c0_43] : memref<1x1xf32, #tpu.memory_space<smem>>
    %102 = arith.addf %101, %100 : f32
    %c0_44 = arith.constant 0 : index
    %c0_45 = arith.constant 0 : index
    %103 = memref.load %arg12[%c0_44, %c0_45] : memref<1x1xf32, #tpu.memory_space<smem>>
    memref.store %102, %arg12[%c0_44, %c0_45] : memref<1x1xf32, #tpu.memory_space<smem>>
    return
  }
  func.func @transform_0(%arg0: i32, %arg1: i32) -> (i32, i32, i32) {
    %c0_i32 = arith.constant 0 : i32
    %c0_i32_0 = arith.constant 0 : i32
    return %arg0, %arg1, %c0_i32 : i32, i32, i32
  }
  func.func @transform_1(%arg0: i32, %arg1: i32) -> (i32, i32, i32) {
    %c0_i32 = arith.constant 0 : i32
    %c0_i32_0 = arith.constant 0 : i32
    return %arg0, %arg1, %c0_i32 : i32, i32, i32
  }
  func.func @transform_2(%arg0: i32, %arg1: i32) -> (i32, i32, i32) {
    %c0_i32 = arith.constant 0 : i32
    %c0_i32_0 = arith.constant 0 : i32
    %c0_i32_1 = arith.constant 0 : i32
    return %arg0, %c0_i32, %c0_i32_0 : i32, i32, i32
  }
  func.func @transform_3(%arg0: i32, %arg1: i32) -> (i32, i32) {
    %c0_i32 = arith.constant 0 : i32
    %c0_i32_0 = arith.constant 0 : i32
    %c0_i32_1 = arith.constant 0 : i32
    return %c0_i32, %c0_i32_0 : i32, i32
  }
  func.func @transform_4(%arg0: i32, %arg1: i32) -> (i32, i32) {
    %c0_i32 = arith.constant 0 : i32
    %c0_i32_0 = arith.constant 0 : i32
    %c0_i32_1 = arith.constant 0 : i32
    return %c0_i32, %c0_i32_0 : i32, i32
  }
  func.func @transform_5(%arg0: i32, %arg1: i32) -> (i32, i32) {
    %c0_i32 = arith.constant 0 : i32
    %c0_i32_0 = arith.constant 0 : i32
    %c0_i32_1 = arith.constant 0 : i32
    return %c0_i32, %c0_i32_0 : i32, i32
  }
  func.func @transform_6(%arg0: i32, %arg1: i32) -> (i32, i32) {
    %c0_i32 = arith.constant 0 : i32
    %c0_i32_0 = arith.constant 0 : i32
    %c0_i32_1 = arith.constant 0 : i32
    return %c0_i32, %c0_i32_0 : i32, i32
  }
  func.func @transform_7(%arg0: i32, %arg1: i32) -> (i32, i32) {
    %c0_i32 = arith.constant 0 : i32
    %c0_i32_0 = arith.constant 0 : i32
    %c0_i32_1 = arith.constant 0 : i32
    return %c0_i32, %c0_i32_0 : i32, i32
  }
  func.func @transform_8(%arg0: i32, %arg1: i32) -> (i32, i32) {
    %c0_i32 = arith.constant 0 : i32
    %c0_i32_0 = arith.constant 0 : i32
    %c0_i32_1 = arith.constant 0 : i32
    return %c0_i32, %c0_i32_0 : i32, i32
  }
  func.func @transform_9(%arg0: i32, %arg1: i32) -> i32 {
    %c0_i32 = arith.constant 0 : i32
    %c0_i32_0 = arith.constant 0 : i32
    return %c0_i32 : i32
  }
  func.func @transform_10(%arg0: i32, %arg1: i32) -> (i32, i32) {
    %c0_i32 = arith.constant 0 : i32
    %c0_i32_0 = arith.constant 0 : i32
    %c0_i32_1 = arith.constant 0 : i32
    return %c0_i32, %c0_i32_0 : i32, i32
  }
}

</mosaic_0001>

<llo_original>
// kernel: hgcl_forward.2
$region0: #{hgcl_forward.2}
  #allocation0 [shape = 'u32[]', space=smem, size = 0x4, offset = 0x4, fixed_abs, tag = 'smem constant byte address 0x4 - core index']
  #allocation1 [shape = 'u32[144,128]{1,0:T(1,128)}', space=vmem, size = 0x12000, scoped, tag = 'internal scratch']
  %s0 = inlined_call_operand.vmem [shape: bf16[12,32], index: 0, kind: input, shape index: {}]
  %s1 = inlined_call_operand.vmem [shape: bf16[32,64], index: 1, kind: input, shape index: {}]
  %s2 = inlined_call_operand.vmem [shape: f32[1,64], index: 2, kind: input, shape index: {}]
  %s3 = inlined_call_operand.vmem [shape: bf16[32,32], index: 3, kind: input, shape index: {}]
  %s4 = inlined_call_operand.vmem [shape: f32[1,32], index: 4, kind: input, shape index: {}]
  %s5 = inlined_call_operand.vmem [shape: bf16[32,32], index: 5, kind: input, shape index: {}]
  %s6 = inlined_call_operand.vmem [shape: f32[1,32], index: 6, kind: input, shape index: {}]
  %s7 = inlined_call_operand.vmem [shape: f32[3], index: 7, kind: input, shape index: {}]
  %s8 = inlined_call_operand.vmem [shape: f32[12,32], index: 8, kind: output, shape index: {}]
  %s9 = sld [smem:[#allocation0]]
  $region46: #{hgcl_forward.2} parent=0
    _
  %s11 = ssub.s32 1, %s9
  %s12 = scalar_select 0, %s11, %s9
  $region1: #{hgcl_forward.2} parent=0
    #allocation2 [shape = 'u8[512]{0}', space=smem, size = 0x200, scoped, tag = 'input window, operand 7, single buffered']
    #allocation3 [shape = 's32[1]{0}', space=sflag, size = 0x4, scoped, tag = 'scoped memory for hgcl_forward.2']
    %13 = vsyncpa [#allocation3], 0
    // Predicated region
    $region2: #{hgcl_forward.2} parent=1 // pred_check
      _
    $region3: #{hgcl_forward.2} parent=1 // pred_check_branch
      %15 = sbr.rel (0) target = $region5
    $region4: #{hgcl_forward.2} parent=1 // pred_region
      _
    $region5: #{hgcl_forward.2} parent=1 // pred_fallthru
      _
    // Predicated region
    $region6: #{hgcl_forward.2} parent=1 // pred_check
      _
    $region7: #{hgcl_forward.2} parent=1 // pred_check_branch
      %17 = sbr.rel (0) target = $region9
    $region8: #{hgcl_forward.2} parent=1 // pred_region
      _
    $region9: #{hgcl_forward.2} parent=1 // pred_fallthru
      _
    // Predicated region
    $region10: #{hgcl_forward.2} parent=1 // pred_check
      _
    $region11: #{hgcl_forward.2} parent=1 // pred_check_branch
      %19 = sbr.rel (0) target = $region13
    $region12: #{hgcl_forward.2} parent=1 // pred_region
      _
    $region13: #{hgcl_forward.2} parent=1 // pred_fallthru
      _
    // Predicated region
    $region14: #{hgcl_forward.2} parent=1 // pred_check
      _
    $region15: #{hgcl_forward.2} parent=1 // pred_check_branch
      %21 = sbr.rel (0) target = $region17
    $region16: #{hgcl_forward.2} parent=1 // pred_region
      _
    $region17: #{hgcl_forward.2} parent=1 // pred_fallthru
      _
    // Predicated region
    $region18: #{hgcl_forward.2} parent=1 // pred_check
      _
    $region19: #{hgcl_forward.2} parent=1 // pred_check_branch
      %23 = sbr.rel (0) target = $region21
    $region20: #{hgcl_forward.2} parent=1 // pred_region
      _
    $region21: #{hgcl_forward.2} parent=1 // pred_fallthru
      _
    // Predicated region
    $region22: #{hgcl_forward.2} parent=1 // pred_check
      _
    $region23: #{hgcl_forward.2} parent=1 // pred_check_branch
      %25 = sbr.rel (0) target = $region25
    $region24: #{hgcl_forward.2} parent=1 // pred_region
      _
    $region25: #{hgcl_forward.2} parent=1 // pred_fallthru
      _
    // Predicated region
    $region26: #{hgcl_forward.2} parent=1 // pred_check
      _
    $region27: #{hgcl_forward.2} parent=1 // pred_check_branch
      %27 = sbr.rel (0) target = $region29
    $region28: #{hgcl_forward.2} parent=1 // pred_region
      _
    $region29: #{hgcl_forward.2} parent=1 // pred_fallthru
      _
    // Predicated region
    $region30: #{hgcl_forward.2} parent=1 // pred_check
      _
    $region31: #{hgcl_forward.2} parent=1 // pred_check_branch
      %29 = sbr.rel (0) target = $region33
    $region32: #{hgcl_forward.2} parent=1 // pred_region
      %s31 = ssub.s32 16, 16
      %32 = vsyncadd [#allocation3], %s31
      %s34 = sshll.u32 %s7, 4
      %s35 = int_to_ptr.vmem [resolvable:$true] %s34
      %37 = dma.vmem_to_smem %s35, 16, [#allocation2], [#allocation3]
    $region33: #{hgcl_forward.2} parent=1 // pred_fallthru
      _
    // Predicated region
    $region34: #{hgcl_forward.2} parent=1 // pred_check
      _
    $region35: #{hgcl_forward.2} parent=1 // pred_check_branch
      %39 = sbr.rel (0) target = $region37
    $region36: #{hgcl_forward.2} parent=1 // pred_region
      %40 = dma.done [#allocation3], 16
    $region37: #{hgcl_forward.2} parent=1 // pred_fallthru
      _
    %41 = sfence
    %v43 = vld [vmem:[%s0] sm:$0xf]
    %v44 = vld [vmem:[%s0 + $0x4] sm:$0x3]
    %v45 = vld [vmem:[%s1] sm:$0xf]
    %v46 = vld [vmem:[%s1 + $0x4] sm:$0xf]
    %v47 = vld [vmem:[%s1 + $0x8] sm:$0xf]
    %v48 = vld [vmem:[%s1 + $0xc] sm:$0xf]
    %v49 = vld [vmem:[%s2] sm:$0x1]
    %v50 = vld [vmem:[%s3] sm:$0xf]
    %v51 = vld [vmem:[%s3 + $0x4] sm:$0xf]
    %v52 = vld [vmem:[%s3 + $0x8] sm:$0xf]
    %v53 = vld [vmem:[%s3 + $0xc] sm:$0xf]
    %v54 = vld [vmem:[%s4] sm:$0x1]
    %v55 = vld [vmem:[%s5] sm:$0xf]
    %v56 = vld [vmem:[%s5 + $0x4] sm:$0xf]
    %v57 = vld [vmem:[%s5 + $0x8] sm:$0xf]
    %v58 = vld [vmem:[%s5 + $0xc] sm:$0xf]
    %v59 = vld [vmem:[%s6] sm:$0x1]
    %s60 = sld [smem:[#allocation2]]
    %s61 = sld [smem:[#allocation2 + $0x1]]
    %s62 = sld [smem:[#allocation2 + $0x2]]
    %v64 = vlaneseq
    %v65 = vshrl.u32 %v64, 7
    %v66 = vsub.s32 0, %v65
    %v67 = vrot.slane %v49, %v66
    %v71 = vunpack.c.l.b16 %v43
    %v72 = vunpack.c.l.b16 %v44
    %v73 = vpack.c.b16 %v72, %v71
    %v78 = vunpack.c.l.b16 %v45
    %v79 = vunpack.c.l.b16 %v46
    %v80 = vunpack.c.l.b16 %v47
    %v81 = vunpack.c.l.b16 %v48
    %v82 = vpack.c.b16 %v79, %v78
    %v83 = vpack.c.b16 %v81, %v80
    %vm86 = vcmask 261120
    %v88 = vsel %vm86, %v73, 0
    %90 = vmatprep.subr.bf16.mxu0 0
    %91 = vmatpush1.bf16.msra.mxu0 %v82
    %92 = vmatprep.subr.bf16.mxu0 0
    %93 = vmatpush1.bf16.msra.mxu0 %v83
    %94 = vmatprep.subr.bf16.mxu0 0
    %95 = vmatpush1.bf16.msra.mxu0 0
    %96 = vmatprep.subr.bf16.mxu0 0
    %97 = vmatpush1.bf16.msra.mxu0 0
    %98 = vmatprep.subr.bf16.mxu0 0
    %99 = vmatpush1.bf16.msra.mxu0 0
    %100 = vmatprep.subr.bf16.mxu0 0
    %101 = vmatpush1.bf16.msra.mxu0 0
    %102 = vmatprep.subr.bf16.mxu0 0
    %103 = vmatpush1.bf16.msra.mxu0 0
    %104 = vmatprep.subr.bf16.mxu0 0
    %105 = vmatpush1.bf16.msra.mxu0 0
    %106 = vmatprep.subr.bf16.mxu0 0
    %107 = vmatpush1.bf16.msra.mxu0 0
    %108 = vmatprep.subr.bf16.mxu0 0
    %109 = vmatpush1.bf16.msra.mxu0 0
    %110 = vmatprep.subr.bf16.mxu0 0
    %111 = vmatpush1.bf16.msra.mxu0 0
    %112 = vmatprep.subr.bf16.mxu0 0
    %113 = vmatpush1.bf16.msra.mxu0 0
    %114 = vmatprep.subr.bf16.mxu0 0
    %115 = vmatpush1.bf16.msra.mxu0 0
    %116 = vmatprep.subr.bf16.mxu0 0
    %117 = vmatpush1.bf16.msra.mxu0 0
    %118 = vmatprep.subr.bf16.mxu0 0
    %119 = vmatpush1.bf16.msra.mxu0 0
    %120 = vmatprep.subr.bf16.mxu0 0
    %121 = vmatpush1.bf16.msra.mxu0 0
    %122 = vmatprep.mubr.bf16.mxu0 0
    %123 = vmatmul.mubr.bf16.gmra.mrb[0].mxu0 %v88
    %v124 = vpop.f32.mrb[0].mxu0
    %v125 = vadd.f32 %v67, %v124
    %v126 = vpop.f32.mrb[0].mxu0
    %v127 = vpop.f32.mrb[0].mxu0
    %v128 = vadd.f32 %v67, %v127
    %v129 = vpop.f32.mrb[0].mxu0
    %130 = vdwg.mxu0
    %v131 = vmax.f32 %v125, 0.0
    %v132 = vmax.f32 %v128, 0.0
    %v133 = vmin.f32 %v125, 0.0
    %v134 = vmin.f32 %v128, 0.0
    %v135 = vstv %s60
    %v136 = vmul.f32 %v135, %v133
    %v137 = vmul.f32 %v135, %v134
    %v138 = vadd.f32 %v131, %v136
    %v139 = vadd.f32 %v132, %v137
    %v140 = vpack.c.bf16 %v139, %v138
    %v142 = vlaneseq
    %v143 = vshrl.u32 %v142, 7
    %v144 = vsub.s32 0, %v143
    %v145 = vrot.slane %v54, %v144
    %v151 = vunpack.c.l.b16 %v50
    %v152 = vunpack.c.l.b16 %v51
    %v153 = vunpack.c.l.b16 %v52
    %v154 = vunpack.c.l.b16 %v53
    %v155 = vpack.c.b16 %v152, %v151
    %v156 = vpack.c.b16 %v154, %v153
    %v160 = vsel %vm86, %v140, 0
    %162 = vmatprep.subr.bf16.mxu0 0
    %163 = vmatpush1.bf16.msra.mxu0 %v155
    %164 = vmatprep.subr.bf16.mxu0 0
    %165 = vmatpush1.bf16.msra.mxu0 %v156
    %166 = vmatprep.subr.bf16.mxu0 0
    %167 = vmatpush1.bf16.msra.mxu0 0
    %168 = vmatprep.subr.bf16.mxu0 0
    %169 = vmatpush1.bf16.msra.mxu0 0
    %170 = vmatprep.subr.bf16.mxu0 0
    %171 = vmatpush1.bf16.msra.mxu0 0
    %172 = vmatprep.subr.bf16.mxu0 0
    %173 = vmatpush1.bf16.msra.mxu0 0
    %174 = vmatprep.subr.bf16.mxu0 0
    %175 = vmatpush1.bf16.msra.mxu0 0
    %176 = vmatprep.subr.bf16.mxu0 0
    %177 = vmatpush1.bf16.msra.mxu0 0
    %178 = vmatprep.subr.bf16.mxu0 0
    %179 = vmatpush1.bf16.msra.mxu0 0
    %180 = vmatprep.subr.bf16.mxu0 0
    %181 = vmatpush1.bf16.msra.mxu0 0
    %182 = vmatprep.subr.bf16.mxu0 0
    %183 = vmatpush1.bf16.msra.mxu0 0
    %184 = vmatprep.subr.bf16.mxu0 0
    %185 = vmatpush1.bf16.msra.mxu0 0
    %186 = vmatprep.subr.bf16.mxu0 0
    %187 = vmatpush1.bf16.msra.mxu0 0
    %188 = vmatprep.subr.bf16.mxu0 0
    %189 = vmatpush1.bf16.msra.mxu0 0
    %190 = vmatprep.subr.bf16.mxu0 0
    %191 = vmatpush1.bf16.msra.mxu0 0
    %192 = vmatprep.subr.bf16.mxu0 0
    %193 = vmatpush1.bf16.msra.mxu0 0
    %194 = vmatprep.mubr.bf16.mxu0 0
    %195 = vmatmul.mubr.bf16.gmra.mrb[0].mxu0 %v160
    %v196 = vpop.f32.mrb[0].mxu0
    %v197 = vadd.f32 %v145, %v196
    %v198 = vpop.f32.mrb[0].mxu0
    %v199 = vpop.f32.mrb[0].mxu0
    %v200 = vadd.f32 %v145, %v199
    %v201 = vpop.f32.mrb[0].mxu0
    %202 = vdwg.mxu0
    %v203 = vmax.f32 %v197, 0.0
    %v204 = vmax.f32 %v200, 0.0
    %v205 = vmin.f32 %v197, 0.0
    %v206 = vmin.f32 %v200, 0.0
    %v207 = vstv %s61
    %v208 = vmul.f32 %v207, %v205
    %v209 = vmul.f32 %v207, %v206
    %v210 = vadd.f32 %v203, %v208
    %v211 = vadd.f32 %v204, %v209
    %v212 = vpack.c.bf16 %v211, %v210
    %v214 = vlaneseq
    %v215 = vshrl.u32 %v214, 7
    %v216 = vsub.s32 0, %v215
    %v217 = vrot.slane %v59, %v216
    %v223 = vunpack.c.l.b16 %v55
    %v224 = vunpack.c.l.b16 %v56
    %v225 = vunpack.c.l.b16 %v57
    %v226 = vunpack.c.l.b16 %v58
    %v227 = vpack.c.b16 %v224, %v223
    %v228 = vpack.c.b16 %v226, %v225
    %v232 = vsel %vm86, %v212, 0
    %234 = vmatprep.subr.bf16.mxu0 0
    %235 = vmatpush1.bf16.msra.mxu0 %v227
    %236 = vmatprep.subr.bf16.mxu0 0
    %237 = vmatpush1.bf16.msra.mxu0 %v228
    %238 = vmatprep.subr.bf16.mxu0 0
    %239 = vmatpush1.bf16.msra.mxu0 0
    %240 = vmatprep.subr.bf16.mxu0 0
    %241 = vmatpush1.bf16.msra.mxu0 0
    %242 = vmatprep.subr.bf16.mxu0 0
    %243 = vmatpush1.bf16.msra.mxu0 0
    %244 = vmatprep.subr.bf16.mxu0 0
    %245 = vmatpush1.bf16.msra.mxu0 0
    %246 = vmatprep.subr.bf16.mxu0 0
    %247 = vmatpush1.bf16.msra.mxu0 0
    %248 = vmatprep.subr.bf16.mxu0 0
    %249 = vmatpush1.bf16.msra.mxu0 0
    %250 = vmatprep.subr.bf16.mxu0 0
    %251 = vmatpush1.bf16.msra.mxu0 0
    %252 = vmatprep.subr.bf16.mxu0 0
    %253 = vmatpush1.bf16.msra.mxu0 0
    %254 = vmatprep.subr.bf16.mxu0 0
    %255 = vmatpush1.bf16.msra.mxu0 0
    %256 = vmatprep.subr.bf16.mxu0 0
    %257 = vmatpush1.bf16.msra.mxu0 0
    %258 = vmatprep.subr.bf16.mxu0 0
    %259 = vmatpush1.bf16.msra.mxu0 0
    %260 = vmatprep.subr.bf16.mxu0 0
    %261 = vmatpush1.bf16.msra.mxu0 0
    %262 = vmatprep.subr.bf16.mxu0 0
    %263 = vmatpush1.bf16.msra.mxu0 0
    %264 = vmatprep.subr.bf16.mxu0 0
    %265 = vmatpush1.bf16.msra.mxu0 0
    %266 = vmatprep.mubr.bf16.mxu0 0
    %267 = vmatmul.mubr.bf16.gmra.mrb[0].mxu0 %v232
    %v268 = vpop.f32.mrb[0].mxu0
    %v269 = vadd.f32 %v217, %v268
    %v270 = vpop.f32.mrb[0].mxu0
    %v271 = vpop.f32.mrb[0].mxu0
    %v272 = vadd.f32 %v217, %v271
    %v273 = vpop.f32.mrb[0].mxu0
    %274 = vdwg.mxu0
    %v275 = vmax.f32 %v269, 0.0
    %v276 = vmax.f32 %v272, 0.0
    %v277 = vmin.f32 %v269, 0.0
    %v278 = vmin.f32 %v272, 0.0
    %v279 = vstv %s62
    %v280 = vmul.f32 %v279, %v277
    %v281 = vmul.f32 %v279, %v278
    %v282 = vadd.f32 %v275, %v280
    %v283 = vadd.f32 %v276, %v281
    %286 = vrot.lane.b32.xlu0 %v125, 96
    %v287 = vpop.permute.xlu0 %286
    %288 = vrot.lane.b32.xlu0 %v128, 96
    %v289 = vpop.permute.xlu0 %288
    %v292 = vadd.f32 %v282, %v287
    %v293 = vadd.f32 %v283, %v289
    %294 = vst.msk [vmem:[%s8] sm:$0xff] %vm86, %v292
    %vm295 = vcmask 257024
    %296 = vst.msk [vmem:[%s8 + $0x8] sm:$0xf] %vm295, %v293
    // Predicated region
    $region38: #{hgcl_forward.2} parent=1 // pred_check
      _
    $region39: #{hgcl_forward.2} parent=1 // pred_check_branch
      %298 = sbr.rel (0) target = $region41
    $region40: #{hgcl_forward.2} parent=1 // pred_region
      _
    $region41: #{hgcl_forward.2} parent=1 // pred_fallthru
      _
    // Predicated region
    $region42: #{hgcl_forward.2} parent=1 // pred_check
      _
    $region43: #{hgcl_forward.2} parent=1 // pred_check_branch
      %300 = sbr.rel (0) target = $region45
    $region44: #{hgcl_forward.2} parent=1 // pred_region
      _
    $region45: #{hgcl_forward.2} parent=1 // pred_fallthru
      _
    %301 = vsyncpa [#allocation3], 1

// kernel: hgcl_forward.3
$region0: #{hgcl_forward.3}
  #allocation0 [shape = 'u32[]', space=smem, size = 0x4, offset = 0x4, fixed_abs, tag = 'smem constant byte address 0x4 - core index']
  #allocation1 [shape = 'u32[144,128]{1,0:T(1,128)}', space=vmem, size = 0x12000, scoped, tag = 'internal scratch']
  %s0 = inlined_call_operand.vmem [shape: bf16[6,16,32], index: 0, kind: input, shape index: {}]
  %s1 = inlined_call_operand.vmem [shape: s32[6,16,1], index: 1, kind: input, shape index: {}]
  %s2 = inlined_call_operand.vmem [shape: f32[6,2,32], index: 2, kind: input, shape index: {}]
  %s3 = inlined_call_operand.vmem [shape: bf16[32,64], index: 3, kind: input, shape index: {}]
  %s4 = inlined_call_operand.vmem [shape: f32[1,64], index: 4, kind: input, shape index: {}]
  %s5 = inlined_call_operand.vmem [shape: bf16[32,32], index: 5, kind: input, shape index: {}]
  %s6 = inlined_call_operand.vmem [shape: f32[1,32], index: 6, kind: input, shape index: {}]
  %s7 = inlined_call_operand.vmem [shape: bf16[32,32], index: 7, kind: input, shape index: {}]
  %s8 = inlined_call_operand.vmem [shape: f32[1,32], index: 8, kind: input, shape index: {}]
  %s9 = inlined_call_operand.vmem [shape: f32[3], index: 9, kind: input, shape index: {}]
  %s10 = inlined_call_operand.hbm [shape: f32[1,1], index: 10, kind: output, shape index: {}]
  %s11 = sld [smem:[#allocation0]]
  $region81: #{hgcl_forward.3} parent=0
    _
  %s13 = ssub.s32 1, %s11
  %s14 = scalar_select 0, %s13, %s11
  $region1: #{hgcl_forward.3} parent=0
    #allocation2 [shape = 'u8[512]{0}', space=smem, size = 0x200, scoped, tag = 'input window, operand 9, single buffered']
    #allocation3 [shape = 's32[2]{0}', space=sflag, size = 0x8, scoped, tag = 'scoped memory for hgcl_forward.3']
    #allocation4 [shape = 's32[2]{0}', space=sflag, size = 0x8, scoped, tag = 'scoped memory for hgcl_forward.3']
    #allocation5 [shape = 'u8[512]{0}', space=smem, size = 0x200, scoped, tag = 'output window, operand 0, single buffered']
    %15 = vsyncpa [#allocation4], 0
    %16 = vsyncpa [#allocation3], 0
    loop: start=0, step=1, limit=8
    $region2: #{hgcl_forward.3} parent=1 // loop_pre_header
      _
    $region3: #{hgcl_forward.3} parent=1 // loop_header
      %s18 = sphi 0, %s22
      %p19 = scmp.ge.s32.totalorder %s18, 8
      %s25 = sphi 0, %s37
      %s26 = sphi 0, %s33
      %s27 = sphi 0, %s25
      %s28 = sphi 0, %s26
      %s29 = sphi 0, %s27
      %s30 = sphi 0, %s28
      %s42 = sphi 0, %s44
      %s45 = sphi 0, %s42
      %s46 = sphi 0, %s45
      %s62 = sphi 0, %s46
      %s70 = sphi 0, %s72
      %s73 = sphi 0, %s70
      %s74 = sphi 0, %s73
      %s90 = sphi 0, %s74
      %s96 = sphi 0, %s98
      %s99 = sphi 0, %s96
      %s100 = sphi 0, %s99
      %s116 = sphi 0, %s100
      %s120 = sphi 0, %s120
      %s122 = sphi 0, %s120
      %s123 = sphi 0, %s122
      %s137 = sphi 0, %s123
      %s141 = sphi 0, %s141
      %s143 = sphi 0, %s141
      %s144 = sphi 0, %s143
      %s158 = sphi 0, %s144
      %s162 = sphi 0, %s162
      %s164 = sphi 0, %s162
      %s165 = sphi 0, %s164
      %s179 = sphi 0, %s165
      %s183 = sphi 0, %s183
      %s185 = sphi 0, %s183
      %s186 = sphi 0, %s185
      %s200 = sphi 0, %s186
      %s204 = sphi 0, %s204
      %s206 = sphi 0, %s204
      %s207 = sphi 0, %s206
      %s221 = sphi 0, %s207
      %s225 = sphi 0, %s225
      %s227 = sphi 0, %s225
      %s228 = sphi 0, %s227
      %s242 = sphi 0, %s228
      %s246 = sphi 0, %s246
      %s248 = sphi 0, %s246
      %s249 = sphi 0, %s248
      %s263 = sphi 0, %s249
      %s267 = sphi 0, %s267
      %s269 = sphi 0, %s267
      %s270 = sphi 0, %s269
      %s284 = sphi 0, %s270
    $region4: #{hgcl_forward.3} parent=1 // loop_header_branch
      %21 = sbr.rel (%p19) target = $region8
    $region5: #{hgcl_forward.3} parent=1 // loop_body
      %s23 = ssub.s32 %s18, 1
      %s24 = ssub.s32 %s18, 2
      %s31 = sadd.s32 1, %s26
      %p32 = scmp.ge.s32.totalorder %s31, 1
      %s33 = scalar_select %p32, 0, %s31
      %s34 = sadd.s32 1, %s25
      %s35 = scalar_select %p32, %s34, %s25
      %p36 = scmp.ge.s32.totalorder %s35, 6
      %s37 = scalar_select %p36, 0, %s35
      %s38 = ssub.s32 %s25, %s37
      %s39 = ssub.s32 %s26, %s33
      %s40 = sor.u32 %s38, %s39
      %p41 = scmp.eq.s32.totalorder %s40, 0
      %s43 = sadd.s32 %s42, 1
      %s44 = scalar_select %p41, %s42, %s43
      %p47 = pneg %p41
      %p48 = scmp.eq.s32.totalorder %s18, 5
      %p49 = por %p47, %p48
      %p50 = scmp.ne.s32.totalorder %s42, %s45
      %p51 = scmp.eq.s32.totalorder %s18, 0
      %p52 = por %p50, %p51
      %p53 = scmp.ne.s32.totalorder %s42, %s45
      %p54 = scmp.eq.s32.totalorder %s23, 5
      %p55 = por %p53, %p54
      %p56 = scmp.ne.s32.totalorder %s45, %s46
      %p57 = scmp.eq.s32.totalorder %s23, 0
      %p58 = por %p56, %p57
      %p59 = scmp.ne.s32.totalorder %s45, %s46
      %p60 = scmp.eq.s32.totalorder %s24, 5
      %p61 = por %p59, %p60
      %p63 = scmp.ne.s32.totalorder %s46, %s62
      %p64 = scmp.eq.s32.totalorder %s24, 0
      %p65 = por %p63, %p64
      %s66 = ssub.s32 %s25, %s37
      %s67 = ssub.s32 %s26, %s33
      %s68 = sor.u32 %s66, %s67
      %p69 = scmp.eq.s32.totalorder %s68, 0
      %s71 = sadd.s32 %s70, 1
      %s72 = scalar_select %p69, %s70, %s71
      %p75 = pneg %p69
      %p76 = scmp.eq.s32.totalorder %s18, 5
      %p77 = por %p75, %p76
      %p78 = scmp.ne.s32.totalorder %s70, %s73
      %p79 = scmp.eq.s32.totalorder %s18, 0
      %p80 = por %p78, %p79
      %p81 = scmp.ne.s32.totalorder %s70, %s73
      %p82 = scmp.eq.s32.totalorder %s23, 5
      %p83 = por %p81, %p82
      %p84 = scmp.ne.s32.totalorder %s73, %s74
      %p85 = scmp.eq.s32.totalorder %s23, 0
      %p86 = por %p84, %p85
      %p87 = scmp.ne.s32.totalorder %s73, %s74
      %p88 = scmp.eq.s32.totalorder %s24, 5
      %p89 = por %p87, %p88
      %p91 = scmp.ne.s32.totalorder %s74, %s90
      %p92 = scmp.eq.s32.totalorder %s24, 0
      %p93 = por %p91, %p92
      %s94 = ssub.s32 %s25, %s37
      %p95 = scmp.eq.s32.totalorder %s94, 0
      %s97 = sadd.s32 %s96, 1
      %s98 = scalar_select %p95, %s96, %s97
      %p101 = pneg %p95
      %p102 = scmp.eq.s32.totalorder %s18, 5
      %p103 = por %p101, %p102
      %p104 = scmp.ne.s32.totalorder %s96, %s99
      %p105 = scmp.eq.s32.totalorder %s18, 0
      %p106 = por %p104, %p105
      %p107 = scmp.ne.s32.totalorder %s96, %s99
      %p108 = scmp.eq.s32.totalorder %s23, 5
      %p109 = por %p107, %p108
      %p110 = scmp.ne.s32.totalorder %s99, %s100
      %p111 = scmp.eq.s32.totalorder %s23, 0
      %p112 = por %p110, %p111
      %p113 = scmp.ne.s32.totalorder %s99, %s100
      %p114 = scmp.eq.s32.totalorder %s24, 5
      %p115 = por %p113, %p114
      %p117 = scmp.ne.s32.totalorder %s100, %s116
      %p118 = scmp.eq.s32.totalorder %s24, 0
      %p119 = por %p117, %p118
      %s121 = sadd.s32 %s120, 1
      %p124 = scmp.eq.s32.totalorder %s18, 5
      %p125 = scmp.ne.s32.totalorder %s120, %s122
      %p126 = scmp.eq.s32.totalorder %s18, 0
      %p127 = por %p125, %p126
      %p128 = scmp.ne.s32.totalorder %s120, %s122
      %p129 = scmp.eq.s32.totalorder %s23, 5
      %p130 = por %p128, %p129
      %p131 = scmp.ne.s32.totalorder %s122, %s123
      %p132 = scmp.eq.s32.totalorder %s23, 0
      %p133 = por %p131, %p132
      %p134 = scmp.ne.s32.totalorder %s122, %s123
      %p135 = scmp.eq.s32.totalorder %s24, 5
      %p136 = por %p134, %p135
      %p138 = scmp.ne.s32.totalorder %s123, %s137
      %p139 = scmp.eq.s32.totalorder %s24, 0
      %p140 = por %p138, %p139
      %s142 = sadd.s32 %s141, 1
      %p145 = scmp.eq.s32.totalorder %s18, 5
      %p146 = scmp.ne.s32.totalorder %s141, %s143
      %p147 = scmp.eq.s32.totalorder %s18, 0
      %p148 = por %p146, %p147
      %p149 = scmp.ne.s32.totalorder %s141, %s143
      %p150 = scmp.eq.s32.totalorder %s23, 5
      %p151 = por %p149, %p150
      %p152 = scmp.ne.s32.totalorder %s143, %s144
      %p153 = scmp.eq.s32.totalorder %s23, 0
      %p154 = por %p152, %p153
      %p155 = scmp.ne.s32.totalorder %s143, %s144
      %p156 = scmp.eq.s32.totalorder %s24, 5
      %p157 = por %p155, %p156
      %p159 = scmp.ne.s32.totalorder %s144, %s158
      %p160 = scmp.eq.s32.totalorder %s24, 0
      %p161 = por %p159, %p160
      %s163 = sadd.s32 %s162, 1
      %p166 = scmp.eq.s32.totalorder %s18, 5
      %p167 = scmp.ne.s32.totalorder %s162, %s164
      %p168 = scmp.eq.s32.totalorder %s18, 0
      %p169 = por %p167, %p168
      %p170 = scmp.ne.s32.totalorder %s162, %s164
      %p171 = scmp.eq.s32.totalorder %s23, 5
      %p172 = por %p170, %p171
      %p173 = scmp.ne.s32.totalorder %s164, %s165
      %p174 = scmp.eq.s32.totalorder %s23, 0
      %p175 = por %p173, %p174
      %p176 = scmp.ne.s32.totalorder %s164, %s165
      %p177 = scmp.eq.s32.totalorder %s24, 5
      %p178 = por %p176, %p177
      %p180 = scmp.ne.s32.totalorder %s165, %s179
      %p181 = scmp.eq.s32.totalorder %s24, 0
      %p182 = por %p180, %p181
      %s184 = sadd.s32 %s183, 1
      %p187 = scmp.eq.s32.totalorder %s18, 5
      %p188 = scmp.ne.s32.totalorder %s183, %s185
      %p189 = scmp.eq.s32.totalorder %s18, 0
      %p190 = por %p188, %p189
      %p191 = scmp.ne.s32.totalorder %s183, %s185
      %p192 = scmp.eq.s32.totalorder %s23, 5
      %p193 = por %p191, %p192
      %p194 = scmp.ne.s32.totalorder %s185, %s186
      %p195 = scmp.eq.s32.totalorder %s23, 0
      %p196 = por %p194, %p195
      %p197 = scmp.ne.s32.totalorder %s185, %s186
      %p198 = scmp.eq.s32.totalorder %s24, 5
      %p199 = por %p197, %p198
      %p201 = scmp.ne.s32.totalorder %s186, %s200
      %p202 = scmp.eq.s32.totalorder %s24, 0
      %p203 = por %p201, %p202
      %s205 = sadd.s32 %s204, 1
      %p208 = scmp.eq.s32.totalorder %s18, 5
      %p209 = scmp.ne.s32.totalorder %s204, %s206
      %p210 = scmp.eq.s32.totalorder %s18, 0
      %p211 = por %p209, %p210
      %p212 = scmp.ne.s32.totalorder %s204, %s206
      %p213 = scmp.eq.s32.totalorder %s23, 5
      %p214 = por %p212, %p213
      %p215 = scmp.ne.s32.totalorder %s206, %s207
      %p216 = scmp.eq.s32.totalorder %s23, 0
      %p217 = por %p215, %p216
      %p218 = scmp.ne.s32.totalorder %s206, %s207
      %p219 = scmp.eq.s32.totalorder %s24, 5
      %p220 = por %p218, %p219
      %p222 = scmp.ne.s32.totalorder %s207, %s221
      %p223 = scmp.eq.s32.totalorder %s24, 0
      %p224 = por %p222, %p223
      %s226 = sadd.s32 %s225, 1
      %p229 = scmp.eq.s32.totalorder %s18, 5
      %p230 = scmp.ne.s32.totalorder %s225, %s227
      %p231 = scmp.eq.s32.totalorder %s18, 0
      %p232 = por %p230, %p231
      %p233 = scmp.ne.s32.totalorder %s225, %s227
      %p234 = scmp.eq.s32.totalorder %s23, 5
      %p235 = por %p233, %p234
      %p236 = scmp.ne.s32.totalorder %s227, %s228
      %p237 = scmp.eq.s32.totalorder %s23, 0
      %p238 = por %p236, %p237
      %p239 = scmp.ne.s32.totalorder %s227, %s228
      %p240 = scmp.eq.s32.totalorder %s24, 5
      %p241 = por %p239, %p240
      %p243 = scmp.ne.s32.totalorder %s228, %s242
      %p244 = scmp.eq.s32.totalorder %s24, 0
      %p245 = por %p243, %p244
      %s247 = sadd.s32 %s246, 1
      %p250 = scmp.eq.s32.totalorder %s18, 5
      %p251 = scmp.ne.s32.totalorder %s246, %s248
      %p252 = scmp.eq.s32.totalorder %s18, 0
      %p253 = por %p251, %p252
      %p254 = scmp.ne.s32.totalorder %s246, %s248
      %p255 = scmp.eq.s32.totalorder %s23, 5
      %p256 = por %p254, %p255
      %p257 = scmp.ne.s32.totalorder %s248, %s249
      %p258 = scmp.eq.s32.totalorder %s23, 0
      %p259 = por %p257, %p258
      %p260 = scmp.ne.s32.totalorder %s248, %s249
      %p261 = scmp.eq.s32.totalorder %s24, 5
      %p262 = por %p260, %p261
      %p264 = scmp.ne.s32.totalorder %s249, %s263
      %p265 = scmp.eq.s32.totalorder %s24, 0
      %p266 = por %p264, %p265
      %s268 = sadd.s32 %s267, 1
      %p271 = scmp.eq.s32.totalorder %s18, 5
      %p272 = scmp.ne.s32.totalorder %s267, %s269
      %p273 = scmp.eq.s32.totalorder %s18, 0
      %p274 = por %p272, %p273
      %p275 = scmp.ne.s32.totalorder %s267, %s269
      %p276 = scmp.eq.s32.totalorder %s23, 5
      %p277 = por %p275, %p276
      %p278 = scmp.ne.s32.totalorder %s269, %s270
      %p279 = scmp.eq.s32.totalorder %s23, 0
      %p280 = por %p278, %p279
      %p281 = scmp.ne.s32.totalorder %s269, %s270
      %p282 = scmp.eq.s32.totalorder %s24, 5
      %p283 = por %p281, %p282
      %p285 = scmp.ne.s32.totalorder %s270, %s284
      %p286 = scmp.eq.s32.totalorder %s24, 0
      %p287 = por %p285, %p286
      %p288 = scmp.le.s32.totalorder 1, %s18
      %p289 = scmp.lt.s32.totalorder %s18, 7
      %p290 = pnand %p288, %p289
      %p291 = pneg %p290
      // Predicated region
      $region9: #{hgcl_forward.3} parent=5 // pred_check
        _
      $region10: #{hgcl_forward.3} parent=5 // pred_check_branch
        %293 = sbr.rel (%p290) target = $region12
      $region11: #{hgcl_forward.3} parent=5 // pred_region
        %s294 = ssub.s32 %s18, 1
        // Predicated region
        $region13: #{hgcl_forward.3} parent=11 // pred_check
          %p295 = pneg %p133
        $region14: #{hgcl_forward.3} parent=11 // pred_check_branch
          %297 = sbr.rel (%p295) target = $region16
        $region15: #{hgcl_forward.3} parent=11 // pred_region
          _
        $region16: #{hgcl_forward.3} parent=11 // pred_fallthru
          _
        // Predicated region
        $region17: #{hgcl_forward.3} parent=11 // pred_check
          %p298 = pneg %p154
        $region18: #{hgcl_forward.3} parent=11 // pred_check_branch
          %300 = sbr.rel (%p298) target = $region20
        $region19: #{hgcl_forward.3} parent=11 // pred_region
          _
        $region20: #{hgcl_forward.3} parent=11 // pred_fallthru
          _
        // Predicated region
        $region21: #{hgcl_forward.3} parent=11 // pred_check
          %p301 = pneg %p175
        $region22: #{hgcl_forward.3} parent=11 // pred_check_branch
          %303 = sbr.rel (%p301) target = $region24
        $region23: #{hgcl_forward.3} parent=11 // pred_region
          _
        $region24: #{hgcl_forward.3} parent=11 // pred_fallthru
          _
        // Predicated region
        $region25: #{hgcl_forward.3} parent=11 // pred_check
          %p304 = pneg %p196
        $region26: #{hgcl_forward.3} parent=11 // pred_check_branch
          %306 = sbr.rel (%p304) target = $region28
        $region27: #{hgcl_forward.3} parent=11 // pred_region
          _
        $region28: #{hgcl_forward.3} parent=11 // pred_fallthru
          _
        // Predicated region
        $region29: #{hgcl_forward.3} parent=11 // pred_check
          %p307 = pneg %p217
        $region30: #{hgcl_forward.3} parent=11 // pred_check_branch
          %309 = sbr.rel (%p307) target = $region32
        $region31: #{hgcl_forward.3} parent=11 // pred_region
          _
        $region32: #{hgcl_forward.3} parent=11 // pred_fallthru
          _
        // Predicated region
        $region33: #{hgcl_forward.3} parent=11 // pred_check
          %p310 = pneg %p238
        $region34: #{hgcl_forward.3} parent=11 // pred_check_branch
          %312 = sbr.rel (%p310) target = $region36
        $region35: #{hgcl_forward.3} parent=11 // pred_region
          _
        $region36: #{hgcl_forward.3} parent=11 // pred_fallthru
          _
        // Predicated region
        $region37: #{hgcl_forward.3} parent=11 // pred_check
          %p313 = pneg %p259
        $region38: #{hgcl_forward.3} parent=11 // pred_check_branch
          %315 = sbr.rel (%p313) target = $region40
        $region39: #{hgcl_forward.3} parent=11 // pred_region
          %s317 = ssub.s32 16, 16
          %318 = vsyncadd [#allocation4], %s317
          %s320 = sshll.u32 %s9, 4
          %s321 = int_to_ptr.vmem [resolvable:$true] %s320
          %323 = dma.vmem_to_smem %s321, 16, [#allocation2], [#allocation4]
        $region40: #{hgcl_forward.3} parent=11 // pred_fallthru
          _
      $region12: #{hgcl_forward.3} parent=5 // pred_fallthru
        _
      %p324 = scmp.lt.s32.totalorder %s18, 6
      // Predicated region
      $region41: #{hgcl_forward.3} parent=5 // pred_check
        %p325 = pneg %p324
      $region42: #{hgcl_forward.3} parent=5 // pred_check_branch
        %327 = sbr.rel (%p325) target = $region44
      $region43: #{hgcl_forward.3} parent=5 // pred_region
        // Predicated region
        $region45: #{hgcl_forward.3} parent=43 // pred_check
          %p328 = pneg %p52
        $region46: #{hgcl_forward.3} parent=43 // pred_check_branch
          %330 = sbr.rel (%p328) target = $region48
        $region47: #{hgcl_forward.3} parent=43 // pred_region
          %s331 = smul.u32 2, %s26
          %p332 = scmp.lt.s32.totalorder %s25, 5
          %s333 = scalar_select %p332, %s25, 5
          %p334 = scmp.lt.s32.totalorder %s331, 1
          %s335 = scalar_select %p334, %s331, 1
          %s336 = smul.addr %s333, 2
          %s337 = sadd.s32 %s335, %s336
          %s338 = smul.addr %s337, 4
          %s339 = scalar_lea.vmem %s0, %s338
          %s340 = smul.u32 2, %s26
        $region48: #{hgcl_forward.3} parent=43 // pred_fallthru
          _
        // Predicated region
        $region49: #{hgcl_forward.3} parent=43 // pred_check
          %p341 = pneg %p80
        $region50: #{hgcl_forward.3} parent=43 // pred_check_branch
          %343 = sbr.rel (%p341) target = $region52
        $region51: #{hgcl_forward.3} parent=43 // pred_region
          %s344 = smul.u32 2, %s26
          %p345 = scmp.lt.s32.totalorder %s25, 5
          %s346 = scalar_select %p345, %s25, 5
          %p347 = scmp.lt.s32.totalorder %s344, 1
          %s348 = scalar_select %p347, %s344, 1
          %s349 = smul.addr %s346, 2
          %s350 = sadd.s32 %s348, %s349
          %s351 = smul.addr %s350, 8
          %s352 = scalar_lea.vmem %s1, %s351
          %s353 = smul.u32 2, %s26
        $region52: #{hgcl_forward.3} parent=43 // pred_fallthru
          _
        // Predicated region
        $region53: #{hgcl_forward.3} parent=43 // pred_check
          %p354 = pneg %p106
        $region54: #{hgcl_forward.3} parent=43 // pred_check_branch
          %356 = sbr.rel (%p354) target = $region56
        $region55: #{hgcl_forward.3} parent=43 // pred_region
          %p357 = scmp.lt.s32.totalorder %s25, 5
          %s358 = scalar_select %p357, %s25, 5
          %s359 = smul.addr %s358, 2
          %s360 = scalar_lea.vmem %s2, %s359
        $region56: #{hgcl_forward.3} parent=43 // pred_fallthru
          _
      $region44: #{hgcl_forward.3} parent=5 // pred_fallthru
        _
      %p361 = scmp.le.s32.totalorder 1, %s18
      %p362 = scmp.lt.s32.totalorder %s18, 7
      %p363 = pnand %p361, %p362
      %p364 = pneg %p363
      // Predicated region
      $region57: #{hgcl_forward.3} parent=5 // pred_check
        _
      $region58: #{hgcl_forward.3} parent=5 // pred_check_branch
        %366 = sbr.rel (%p363) target = $region60
      $region59: #{hgcl_forward.3} parent=5 // pred_region
        %s367 = ssub.s32 %s18, 1
        // Predicated region
        $region61: #{hgcl_forward.3} parent=59 // pred_check
          %p368 = pneg %p259
        $region62: #{hgcl_forward.3} parent=59 // pred_check_branch
          %370 = sbr.rel (%p368) target = $region64
        $region63: #{hgcl_forward.3} parent=59 // pred_region
          %371 = dma.done [#allocation4], 16
        $region64: #{hgcl_forward.3} parent=59 // pred_fallthru
          _
        %372 = sfence
        %s373 = smul.u32 2, %s28
        %p374 = scmp.lt.s32.totalorder %s27, 5
        %s375 = scalar_select %p374, %s27, 5
        %p376 = scmp.lt.s32.totalorder %s373, 1
        %s377 = scalar_select %p376, %s373, 1
        %s378 = smul.addr %s375, 2
        %s379 = sadd.s32 %s377, %s378
        %s380 = smul.addr %s379, 4
        %s381 = scalar_lea.vmem %s0, %s380
        %p382 = pneg %p58
        %p383 = pneg %p55
        %s384 = smul.u32 2, %s28
        %p385 = scmp.lt.s32.totalorder %s27, 5
        %s386 = scalar_select %p385, %s27, 5
        %p387 = scmp.lt.s32.totalorder %s384, 1
        %s388 = scalar_select %p387, %s384, 1
        %s389 = smul.addr %s386, 2
        %s390 = sadd.s32 %s388, %s389
        %s391 = smul.addr %s390, 8
        %s392 = scalar_lea.vmem %s1, %s391
        %p393 = pneg %p86
        %p394 = pneg %p83
        %p395 = scmp.lt.s32.totalorder %s27, 5
        %s396 = scalar_select %p395, %s27, 5
        %s397 = smul.addr %s396, 2
        %s398 = scalar_lea.vmem %s2, %s397
        %p399 = pneg %p112
        %p400 = pneg %p109
        %p401 = pneg %p133
        %p402 = pneg %p130
        %p403 = pneg %p154
        %p404 = pneg %p151
        %p405 = pneg %p175
        %p406 = pneg %p172
        %p407 = pneg %p196
        %p408 = pneg %p193
        %p409 = pneg %p217
        %p410 = pneg %p214
        %p411 = pneg %p238
        %p412 = pneg %p235
        %p413 = pneg %p259
        %p414 = pneg %p256
        %p415 = pneg %p280
        %p416 = pneg %p277
        %s417 = smul.u32 2, %s28
        %p418 = scmp.lt.s32.totalorder %s27, 5
        %s419 = scalar_select %p418, %s27, 5
        %p420 = scmp.lt.s32.totalorder %s417, 1
        %s421 = scalar_select %p420, %s417, 1
        %s422 = smul.addr %s419, 2
        %s423 = sadd.s32 %s421, %s422
        %s424 = smul.addr %s423, 4
        %s425 = scalar_lea.vmem %s0, %s424
        %s426 = smul.u32 2, %s28
        %s427 = smul.u32 2, %s28
        %p428 = scmp.lt.s32.totalorder %s27, 5
        %s429 = scalar_select %p428, %s27, 5
        %p430 = scmp.lt.s32.totalorder %s427, 1
        %s431 = scalar_select %p430, %s427, 1
        %s432 = smul.addr %s429, 2
        %s433 = sadd.s32 %s431, %s432
        %s434 = smul.addr %s433, 8
        %s435 = scalar_lea.vmem %s1, %s434
        %s436 = smul.u32 2, %s28
        %p437 = scmp.lt.s32.totalorder %s27, 5
        %s438 = scalar_select %p437, %s27, 5
        %s439 = smul.addr %s438, 2
        %s440 = scalar_lea.vmem %s2, %s439
        %p442 = scmp.eq.s32.totalorder %s27, 0
        %p443 = scmp.eq.s32.totalorder %s28, 0
        %p444 = pnand %p442, %p443
        %p445 = pneg %p444
        // Predicated region
        $region65: #{hgcl_forward.3} parent=59 // pred_check
          _
        $region66: #{hgcl_forward.3} parent=59 // pred_check_branch
          %447 = sbr.rel (%p444) target = $region68
        $region67: #{hgcl_forward.3} parent=59 // pred_region
          %s448 = scalar_lea.smem [#allocation5], 0
          %449 = sst [smem:[%s448]] 0.0
        $region68: #{hgcl_forward.3} parent=59 // pred_fallthru
          _
        %v450 = vld [vmem:[%s425] sm:$0xf]
        %v451 = vld [vmem:[%s425 + $0x4] sm:$0xf]
        %v452 = vld [vmem:[%s3] sm:$0xf]
        %v453 = vld [vmem:[%s3 + $0x4] sm:$0xf]
        %v454 = vld [vmem:[%s3 + $0x8] sm:$0xf]
        %v455 = vld [vmem:[%s3 + $0xc] sm:$0xf]
        %v456 = vld [vmem:[%s4] sm:$0x1]
        %v457 = vld [vmem:[%s5] sm:$0xf]
        %v458 = vld [vmem:[%s5 + $0x4] sm:$0xf]
        %v459 = vld [vmem:[%s5 + $0x8] sm:$0xf]
        %v460 = vld [vmem:[%s5 + $0xc] sm:$0xf]
        %v461 = vld [vmem:[%s6] sm:$0x1]
        %v462 = vld [vmem:[%s7] sm:$0xf]
        %v463 = vld [vmem:[%s7 + $0x4] sm:$0xf]
        %v464 = vld [vmem:[%s7 + $0x8] sm:$0xf]
        %v465 = vld [vmem:[%s7 + $0xc] sm:$0xf]
        %v466 = vld [vmem:[%s8] sm:$0x1]
        %s467 = sld [smem:[#allocation2]]
        %s468 = sld [smem:[#allocation2 + $0x1]]
        %s469 = sld [smem:[#allocation2 + $0x2]]
        %v471 = vlaneseq
        %v472 = vshrl.u32 %v471, 7
        %v473 = vsub.s32 0, %v472
        %v474 = vrot.slane %v456, %v473
        %v478 = vunpack.c.l.b16 %v450
        %v479 = vunpack.c.l.b16 %v451
        %v480 = vpack.c.b16 %v479, %v478
        %v485 = vunpack.c.l.b16 %v452
        %v486 = vunpack.c.l.b16 %v453
        %v487 = vunpack.c.l.b16 %v454
        %v488 = vunpack.c.l.b16 %v455
        %v489 = vpack.c.b16 %v486, %v485
        %v490 = vpack.c.b16 %v488, %v487
        %vm493 = vcmask 261120
        %v495 = vsel %vm493, %v480, 0
        %497 = vmatprep.subr.bf16.mxu0 0
        %498 = vmatpush1.bf16.msra.mxu0 %v489
        %499 = vmatprep.subr.bf16.mxu0 0
        %500 = vmatpush1.bf16.msra.mxu0 %v490
        %501 = vmatprep.subr.bf16.mxu0 0
        %502 = vmatpush1.bf16.msra.mxu0 0
        %503 = vmatprep.subr.bf16.mxu0 0
        %504 = vmatpush1.bf16.msra.mxu0 0
        %505 = vmatprep.subr.bf16.mxu0 0
        %506 = vmatpush1.bf16.msra.mxu0 0
        %507 = vmatprep.subr.bf16.mxu0 0
        %508 = vmatpush1.bf16.msra.mxu0 0
        %509 = vmatprep.subr.bf16.mxu0 0
        %510 = vmatpush1.bf16.msra.mxu0 0
        %511 = vmatprep.subr.bf16.mxu0 0
        %512 = vmatpush1.bf16.msra.mxu0 0
        %513 = vmatprep.subr.bf16.mxu0 0
        %514 = vmatpush1.bf16.msra.mxu0 0
        %515 = vmatprep.subr.bf16.mxu0 0
        %516 = vmatpush1.bf16.msra.mxu0 0
        %517 = vmatprep.subr.bf16.mxu0 0
        %518 = vmatpush1.bf16.msra.mxu0 0
        %519 = vmatprep.subr.bf16.mxu0 0
        %520 = vmatpush1.bf16.msra.mxu0 0
        %521 = vmatprep.subr.bf16.mxu0 0
        %522 = vmatpush1.bf16.msra.mxu0 0
        %523 = vmatprep.subr.bf16.mxu0 0
        %524 = vmatpush1.bf16.msra.mxu0 0
        %525 = vmatprep.subr.bf16.mxu0 0
        %526 = vmatpush1.bf16.msra.mxu0 0
        %527 = vmatprep.subr.bf16.mxu0 0
        %528 = vmatpush1.bf16.msra.mxu0 0
        %529 = vmatprep.mubr.bf16.mxu0 0
        %530 = vmatmul.mubr.bf16.gmra.mrb[0].mxu0 %v495
        %v531 = vpop.f32.mrb[0].mxu0
        %v532 = vadd.f32 %v474, %v531
        %v533 = vpop.f32.mrb[0].mxu0
        %v534 = vpop.f32.mrb[0].mxu0
        %v535 = vadd.f32 %v474, %v534
        %v536 = vpop.f32.mrb[0].mxu0
        %537 = vdwg.mxu0
        %v538 = vmax.f32 %v532, 0.0
        %v539 = vmax.f32 %v535, 0.0
        %v540 = vmin.f32 %v532, 0.0
        %v541 = vmin.f32 %v535, 0.0
        %v542 = vstv %s467
        %v543 = vmul.f32 %v542, %v540
        %v544 = vmul.f32 %v542, %v541
        %v545 = vadd.f32 %v538, %v543
        %v546 = vadd.f32 %v539, %v544
        %v547 = vpack.c.bf16 %v546, %v545
        %v549 = vlaneseq
        %v550 = vshrl.u32 %v549, 7
        %v551 = vsub.s32 0, %v550
        %v552 = vrot.slane %v461, %v551
        %v558 = vunpack.c.l.b16 %v457
        %v559 = vunpack.c.l.b16 %v458
        %v560 = vunpack.c.l.b16 %v459
        %v561 = vunpack.c.l.b16 %v460
        %v562 = vpack.c.b16 %v559, %v558
        %v563 = vpack.c.b16 %v561, %v560
        %v567 = vsel %vm493, %v547, 0
        %569 = vmatprep.subr.bf16.mxu0 0
        %570 = vmatpush1.bf16.msra.mxu0 %v562
        %571 = vmatprep.subr.bf16.mxu0 0
        %572 = vmatpush1.bf16.msra.mxu0 %v563
        %573 = vmatprep.subr.bf16.mxu0 0
        %574 = vmatpush1.bf16.msra.mxu0 0
        %575 = vmatprep.subr.bf16.mxu0 0
        %576 = vmatpush1.bf16.msra.mxu0 0
        %577 = vmatprep.subr.bf16.mxu0 0
        %578 = vmatpush1.bf16.msra.mxu0 0
        %579 = vmatprep.subr.bf16.mxu0 0
        %580 = vmatpush1.bf16.msra.mxu0 0
        %581 = vmatprep.subr.bf16.mxu0 0
        %582 = vmatpush1.bf16.msra.mxu0 0
        %583 = vmatprep.subr.bf16.mxu0 0
        %584 = vmatpush1.bf16.msra.mxu0 0
        %585 = vmatprep.subr.bf16.mxu0 0
        %586 = vmatpush1.bf16.msra.mxu0 0
        %587 = vmatprep.subr.bf16.mxu0 0
        %588 = vmatpush1.bf16.msra.mxu0 0
        %589 = vmatprep.subr.bf16.mxu0 0
        %590 = vmatpush1.bf16.msra.mxu0 0
        %591 = vmatprep.subr.bf16.mxu0 0
        %592 = vmatpush1.bf16.msra.mxu0 0
        %593 = vmatprep.subr.bf16.mxu0 0
        %594 = vmatpush1.bf16.msra.mxu0 0
        %595 = vmatprep.subr.bf16.mxu0 0
        %596 = vmatpush1.bf16.msra.mxu0 0
        %597 = vmatprep.subr.bf16.mxu0 0
        %598 = vmatpush1.bf16.msra.mxu0 0
        %599 = vmatprep.subr.bf16.mxu0 0
        %600 = vmatpush1.bf16.msra.mxu0 0
        %601 = vmatprep.mubr.bf16.mxu0 0
        %602 = vmatmul.mubr.bf16.gmra.mrb[0].mxu0 %v567
        %v603 = vpop.f32.mrb[0].mxu0
        %v604 = vadd.f32 %v552, %v603
        %v605 = vpop.f32.mrb[0].mxu0
        %v606 = vpop.f32.mrb[0].mxu0
        %v607 = vadd.f32 %v552, %v606
        %v608 = vpop.f32.mrb[0].mxu0
        %609 = vdwg.mxu0
        %v610 = vmax.f32 %v604, 0.0
        %v611 = vmax.f32 %v607, 0.0
        %v612 = vmin.f32 %v604, 0.0
        %v613 = vmin.f32 %v607, 0.0
        %v614 = vstv %s468
        %v615 = vmul.f32 %v614, %v612
        %v616 = vmul.f32 %v614, %v613
        %v617 = vadd.f32 %v610, %v615
        %v618 = vadd.f32 %v611, %v616
        %v619 = vpack.c.bf16 %v618, %v617
        %v621 = vlaneseq
        %v622 = vshrl.u32 %v621, 7
        %v623 = vsub.s32 0, %v622
        %v624 = vrot.slane %v466, %v623
        %v630 = vunpack.c.l.b16 %v462
        %v631 = vunpack.c.l.b16 %v463
        %v632 = vunpack.c.l.b16 %v464
        %v633 = vunpack.c.l.b16 %v465
        %v634 = vpack.c.b16 %v631, %v630
        %v635 = vpack.c.b16 %v633, %v632
        %v639 = vsel %vm493, %v619, 0
        %641 = vmatprep.subr.bf16.mxu0 0
        %642 = vmatpush1.bf16.msra.mxu0 %v634
        %643 = vmatprep.subr.bf16.mxu0 0
        %644 = vmatpush1.bf16.msra.mxu0 %v635
        %645 = vmatprep.subr.bf16.mxu0 0
        %646 = vmatpush1.bf16.msra.mxu0 0
        %647 = vmatprep.subr.bf16.mxu0 0
        %648 = vmatpush1.bf16.msra.mxu0 0
        %649 = vmatprep.subr.bf16.mxu0 0
        %650 = vmatpush1.bf16.msra.mxu0 0
        %651 = vmatprep.subr.bf16.mxu0 0
        %652 = vmatpush1.bf16.msra.mxu0 0
        %653 = vmatprep.subr.bf16.mxu0 0
        %654 = vmatpush1.bf16.msra.mxu0 0
        %655 = vmatprep.subr.bf16.mxu0 0
        %656 = vmatpush1.bf16.msra.mxu0 0
        %657 = vmatprep.subr.bf16.mxu0 0
        %658 = vmatpush1.bf16.msra.mxu0 0
        %659 = vmatprep.subr.bf16.mxu0 0
        %660 = vmatpush1.bf16.msra.mxu0 0
        %661 = vmatprep.subr.bf16.mxu0 0
        %662 = vmatpush1.bf16.msra.mxu0 0
        %663 = vmatprep.subr.bf16.mxu0 0
        %664 = vmatpush1.bf16.msra.mxu0 0
        %665 = vmatprep.subr.bf16.mxu0 0
        %666 = vmatpush1.bf16.msra.mxu0 0
        %667 = vmatprep.subr.bf16.mxu0 0
        %668 = vmatpush1.bf16.msra.mxu0 0
        %669 = vmatprep.subr.bf16.mxu0 0
        %670 = vmatpush1.bf16.msra.mxu0 0
        %671 = vmatprep.subr.bf16.mxu0 0
        %672 = vmatpush1.bf16.msra.mxu0 0
        %673 = vmatprep.mubr.bf16.mxu0 0
        %674 = vmatmul.mubr.bf16.gmra.mrb[0].mxu0 %v639
        %v675 = vpop.f32.mrb[0].mxu0
        %v676 = vadd.f32 %v624, %v675
        %v677 = vpop.f32.mrb[0].mxu0
        %v678 = vpop.f32.mrb[0].mxu0
        %v679 = vadd.f32 %v624, %v678
        %v680 = vpop.f32.mrb[0].mxu0
        %681 = vdwg.mxu0
        %v682 = vmax.f32 %v676, 0.0
        %v683 = vmax.f32 %v679, 0.0
        %v684 = vmin.f32 %v676, 0.0
        %v685 = vmin.f32 %v679, 0.0
        %v686 = vstv %s469
        %v687 = vmul.f32 %v686, %v684
        %v688 = vmul.f32 %v686, %v685
        %v689 = vadd.f32 %v682, %v687
        %v690 = vadd.f32 %v683, %v688
        %693 = vrot.lane.b32.xlu0 %v532, 96
        %v694 = vpop.permute.xlu0 %693
        %695 = vrot.lane.b32.xlu0 %v535, 96
        %v696 = vpop.permute.xlu0 %695
        %v699 = vadd.f32 %v689, %v694
        %v700 = vadd.f32 %v690, %v696
        %v701 = vld [vmem:[%s440] sm:$0x3]
        %v703 = vsel %vm493, %v699, 0
        %v706 = vsel %vm493, %v700, 0
        %v709 = vsel %vm493, %v701, 0
        %711 = vmatprep.subr.mxu0 0.0
        %712 = vmatpush1.xpose.msra.mxu0 %v709
        %713 = vmatprep.subr.mxu0 0.0
        %714 = vmatpush1.xpose.msra.mxu0 0.0
        %715 = vmatprep.subr.mxu0 0.0
        %716 = vmatpush1.xpose.msra.mxu0 0.0
        %717 = vmatprep.subr.mxu0 0.0
        %718 = vmatpush1.xpose.msra.mxu0 0.0
        %719 = vmatprep.subr.mxu0 0.0
        %720 = vmatpush1.xpose.msra.mxu0 0.0
        %721 = vmatprep.subr.mxu0 0.0
        %722 = vmatpush1.xpose.msra.mxu0 0.0
        %723 = vmatprep.subr.mxu0 0.0
        %724 = vmatpush1.xpose.msra.mxu0 0.0
        %725 = vmatprep.subr.mxu0 0.0
        %726 = vmatpush1.xpose.msra.mxu0 0.0
        %727 = vmatprep.subr.mxu0 0.0
        %728 = vmatpush1.xpose.msra.mxu0 0.0
        %729 = vmatprep.subr.mxu0 0.0
        %730 = vmatpush1.xpose.msra.mxu0 0.0
        %731 = vmatprep.subr.mxu0 0.0
        %732 = vmatpush1.xpose.msra.mxu0 0.0
        %733 = vmatprep.subr.mxu0 0.0
        %734 = vmatpush1.xpose.msra.mxu0 0.0
        %735 = vmatprep.subr.mxu0 0.0
        %736 = vmatpush1.xpose.msra.mxu0 0.0
        %737 = vmatprep.subr.mxu0 0.0
        %738 = vmatpush1.xpose.msra.mxu0 0.0
        %739 = vmatprep.subr.mxu0 0.0
        %740 = vmatpush1.xpose.msra.mxu0 0.0
        %741 = vmatprep.subr.mxu0 0.0
        %742 = vmatpush1.xpose.msra.mxu0 0.0
        %743 = vmatprep.subr.mxu0 0.0
        %744 = vmatpush1.xpose.msra.mxu0 0.0
        %745 = vmatprep.subr.mxu0 0.0
        %746 = vmatpush1.xpose.msra.mxu0 0.0
        %747 = vmatprep.subr.mxu0 0.0
        %748 = vmatpush1.xpose.msra.mxu0 0.0
        %749 = vmatprep.subr.mxu0 0.0
        %750 = vmatpush1.xpose.msra.mxu0 0.0
        %751 = vmatprep.subr.mxu0 0.0
        %752 = vmatpush1.xpose.msra.mxu0 0.0
        %753 = vmatprep.subr.mxu0 0.0
        %754 = vmatpush1.xpose.msra.mxu0 0.0
        %755 = vmatprep.subr.mxu0 0.0
        %756 = vmatpush1.xpose.msra.mxu0 0.0
        %757 = vmatprep.subr.mxu0 0.0
        %758 = vmatpush1.xpose.msra.mxu0 0.0
        %759 = vmatprep.subr.mxu0 0.0
        %760 = vmatpush1.xpose.msra.mxu0 0.0
        %761 = vmatprep.subr.mxu0 0.0
        %762 = vmatpush1.xpose.msra.mxu0 0.0
        %763 = vmatprep.subr.mxu0 0.0
        %764 = vmatpush1.xpose.msra.mxu0 0.0
        %765 = vmatprep.subr.mxu0 0.0
        %766 = vmatpush1.xpose.msra.mxu0 0.0
        %767 = vmatprep.subr.mxu0 0.0
        %768 = vmatpush1.xpose.msra.mxu0 0.0
        %769 = vmatprep.subr.mxu0 0.0
        %770 = vmatpush1.xpose.msra.mxu0 0.0
        %771 = vmatprep.subr.mxu0 0.0
        %772 = vmatpush1.xpose.msra.mxu0 0.0
        %773 = vmatprep.subr.mxu0 0.0
        %774 = vmatpush1.xpose.msra.mxu0 0.0
        %775 = vmatprep.mubr.f32.mxu0 0.0
        %776 = vmatmul.mubr.f32.gmra.mrb[0].mxu0 %v703
        %v777 = vpop.f32.mrb[0].mxu0
        %v778 = vadd.f32 0.0, %v777
        %v779 = vpop.f32.mrb[0].mxu0
        %780 = vmatprep.mubr.f32.mxu0 0.0
        %781 = vmatmul.mubr.f32.gmra.mrb[0].mxu0 %v706
        %v782 = vpop.f32.mrb[0].mxu0
        %v783 = vadd.f32 0.0, %v782
        %v784 = vpop.f32.mrb[0].mxu0
        %785 = vdwg.mxu0
        %v786 = vld [vmem:[%s435] sm:$0xff]
        %v787 = vld [vmem:[%s435 + $0x8] sm:$0xff]
        %v788 = vlaneseq
        %v789 = vand.u32 %v788, 127
        %790 = vset.pattern.permute.xlu0 0
        %791 = vperm.xlu0 %790, %v786
        %v792 = vpop.permute.xlu0 %791
        %793 = vset.pattern.permute.xlu0 0
        %794 = vperm.xlu0 %793, %v787
        %v795 = vpop.permute.xlu0 %794
        %vm796 = vcmp.eq.s32.totalorder %v789, %v792
        %vm797 = vcmp.eq.s32.totalorder %v789, %v795
        %v798 = vsel %vm796, 1, 0
        %v799 = vsel %vm797, 1, 0
        %v800 = vcvt.s32.f32 %v798
        %v801 = vcvt.s32.f32 %v799
        %vm802 = vcmp.ge.s32.totalorder %v786, 0
        %vm803 = vcmp.ge.s32.totalorder %v787, 0
        %v804 = vsel %vm802, 1, 0
        %v805 = vsel %vm803, 1, 0
        %v806 = vcvt.s32.f32 %v804
        %v807 = vcvt.s32.f32 %v805
        %v808 = vsub.f32 1.0, %v800
        %v809 = vsub.f32 1.0, %v801
        %811 = vset.pattern.permute.xlu0 0
        %812 = vperm.xlu0 %811, %v806
        %v813 = vpop.permute.xlu0 %812
        %816 = vset.pattern.permute.xlu0 0
        %817 = vperm.xlu0 %816, %v807
        %v818 = vpop.permute.xlu0 %817
        %v820 = vmul.f32 %v813, %v808
        %v821 = vmul.f32 %v818, %v809
        %v822 = vsub.f32 0.0, %v778
        %v823 = vsub.f32 0.0, %v783
        %v824 = vmax.f32 %v822, 0.0
        %v825 = vmax.f32 %v823, 0.0
        %vm826 = vcmp.ne.f32.partialorder %v822, %v822
        %vm827 = vcmp.ne.f32.partialorder %v823, %v823
        %v828 = vadd.f32 %v822, 0.0
        %v829 = vadd.f32 %v823, 0.0
        %v830 = vand.u32 2147483647, %v822
        %v831 = vand.u32 2147483647, %v823
        %v832 = vsub.f32 0.0, %v830
        %v833 = vsub.f32 0.0, %v831
        %v834 = vmul.f32 %v832, 1.442695
        %v835 = vpow.pop %v834
        %v836 = vmul.f32 %v833, 1.442695
        %v837 = vpow.pop %v836
        %v838 = vadd.f32 %v835, 1.0
        %v839 = vlog2.pop %v838
        %v840 = vmul.f32 %v839, 0.6931472
        %v841 = vmul.f32 -0.5, %v835
        %v842 = vadd.f32 %v841, 1.0
        %v843 = vmul.f32 %v842, %v835
        %v844 = vand.u32 2147483647, %v835
        %vm845 = vcmp.lt.f32.partialorder %v844, 0.0004427343
        %v846 = vsel %vm845, %v843, %v840
        %v847 = vadd.f32 %v837, 1.0
        %v848 = vlog2.pop %v847
        %v849 = vmul.f32 %v848, 0.6931472
        %v850 = vmul.f32 -0.5, %v837
        %v851 = vadd.f32 %v850, 1.0
        %v852 = vmul.f32 %v851, %v837
        %v853 = vand.u32 2147483647, %v837
        %vm854 = vcmp.lt.f32.partialorder %v853, 0.0004427343
        %v855 = vsel %vm854, %v852, %v849
        %v856 = vadd.f32 %v824, %v846
        %v857 = vadd.f32 %v825, %v855
        %v858 = vsel %vm826, %v828, %v856
        %v859 = vsel %vm827, %v829, %v857
        %v860 = vsub.f32 0.6931472, %v858
        %v861 = vsub.f32 0.6931472, %v859
        %v862 = vadd.f32 %v778, %v858
        %v863 = vadd.f32 %v783, %v859
        %v864 = vsub.f32 %v862, 0.6931472
        %v865 = vsub.f32 %v863, 0.6931472
        %v866 = vmul.f32 %v820, %v864
        %v867 = vmul.f32 %v821, %v865
        %v868 = vmul.f32 %v866, 0.0625
        %v869 = vmul.f32 %v867, 0.0625
        %v870 = vmul.f32 %v800, %v860
        %v871 = vmul.f32 %v801, %v861
        %v872 = vmul.f32 %v870, 0.0625
        %v873 = vmul.f32 %v871, 0.0625
        %v874 = vsub.f32 %v868, %v872
        %v875 = vsub.f32 %v869, %v873
        %vm876 = vcmask 15360
        %v877 = vsel %vm876, %v874, 0.0
        %v878 = vsel %vm876, %v875, 0.0
        %v879 = vadd.f32 %v877, %v878
        %880 = vadd.xlane.f32.xlu0 %v879
        %v881 = vpop.xlane.xlu0 %880
        %v882 = vrot.slane %v881, 4
        %v883 = vadd.f32 %v881, %v882
        %v884 = vrot.slane %v883, 2
        %v885 = vadd.f32 %v883, %v884
        %v886 = vrot.slane %v885, 1
        %v887 = vadd.f32 %v885, %v886
        %s888 = vtos %v887
        %s889 = sld [smem:[#allocation5]]
        %s890 = sadd.f32 %s889, %s888
        %s891 = scalar_lea.smem [#allocation5], 0
        %892 = sst [smem:[%s891]] %s890
        // Predicated region
        $region69: #{hgcl_forward.3} parent=59 // pred_check
          %p893 = pneg %p277
        $region70: #{hgcl_forward.3} parent=59 // pred_check_branch
          %895 = sbr.rel (%p893) target = $region72
        $region71: #{hgcl_forward.3} parent=59 // pred_region
          %s897 = ssub.s32 16, 16
          %898 = vsyncadd [#allocation3], %s897
          %901 = dma.smem_to_hbm [#allocation5], 16, %s10, [#allocation3]
        $region72: #{hgcl_forward.3} parent=59 // pred_fallthru
          _
        // Predicated region
        $region73: #{hgcl_forward.3} parent=59 // pred_check
          %p902 = pneg %p277
        $region74: #{hgcl_forward.3} parent=59 // pred_check_branch
          %904 = sbr.rel (%p902) target = $region76
        $region75: #{hgcl_forward.3} parent=59 // pred_region
          %905 = dma.done [#allocation3], 16
        $region76: #{hgcl_forward.3} parent=59 // pred_fallthru
          _
        %906 = sfence
      $region60: #{hgcl_forward.3} parent=5 // pred_fallthru
        _
      %p907 = scmp.le.s32.totalorder 2, %s18
      // Predicated region
      $region77: #{hgcl_forward.3} parent=5 // pred_check
        %p908 = pneg %p907
      $region78: #{hgcl_forward.3} parent=5 // pred_check_branch
        %910 = sbr.rel (%p908) target = $region80
      $region79: #{hgcl_forward.3} parent=5 // pred_region
        %s911 = ssub.s32 %s18, 2
      $region80: #{hgcl_forward.3} parent=5 // pred_fallthru
        _
    $region6: #{hgcl_forward.3} parent=1 // loop_footer
      %s22 = sadd.s32 1, %s18
    $region7: #{hgcl_forward.3} parent=1 // loop_footer_branch
      %17 = sbr.rel target = $region3
    $region8: #{hgcl_forward.3} parent=1 // loop_exit
      _
    %912 = vsyncpa [#allocation3], 1
    %s913 = scalar_lea.sflag [#allocation3], 1
    %914 = vsyncpa %s913, 1
    %915 = vsyncpa [#allocation4], 1
    %s916 = scalar_lea.sflag [#allocation4], 1
    %917 = vsyncpa %s916, 1

</llo_original>
